<compile_context>
chip_gen: v5e
topology: v5e:2x2
jax: 0.10.0
libtpu: 0.0.40
codegen_flags: <defaults>
</compile_context>

<pallas_src>
import functools
import math

import jax
import jax.numpy as jnp
from jax import lax
from jax.experimental import pallas as pl
from jax.experimental.pallas import tpu as pltpu

STD_INIT = 0.5
MIN_SIGMA = 1e-3


# ----------------------------- small helpers -------------------------------

def _round_up(x, m):
    return (x + m - 1) // m * m


def _m_tiling(m, row_block):
    """Pick (padded_M, block_m) so block_m is 8-aligned or full-extent."""
    if m >= row_block:
        m_pad = _round_up(m, row_block)
        return m_pad, row_block
    m_pad = _round_up(max(m, 1), 8)
    return m_pad, m_pad


def _im2col(x, kh, kw, stride):
    """(B, C, H, W) -> (B*OH*OW, C*kh*kw) patches, feature order (C, kh, kw)
    (matches torch Conv2d weight.reshape(C_out, C_in*kh*kw))."""
    b, c, h, w = x.shape
    oh = (h - kh) // stride + 1
    ow = (w - kw) // stride + 1
    patches = []
    for i in range(kh):
        for j in range(kw):
            patches.append(x[:, :, i:i + stride * oh:stride, j:j + stride * ow:stride])
    p = jnp.stack(patches, axis=0).reshape(kh, kw, b, c, oh, ow)
    p = p.transpose(2, 4, 5, 3, 0, 1)              # (B, OH, OW, C, kh, kw)
    return p.reshape(b * oh * ow, c * kh * kw), (oh, ow)


# ----------------------------- Pallas kernels ------------------------------

def _linear_relu_kernel(x_ref, w_ref, b_ref, o_ref, *, apply_relu):
    """One fused (rows x K) @ (K x N_pad) + bias (+ReLU) tile. f32 accumulation."""
    acc = jnp.dot(x_ref[...], w_ref[...], preferred_element_type=jnp.float32)
    acc = acc + b_ref[...]                          # bias kept f32
    if apply_relu:
        acc = jnp.maximum(acc, 0.0)
    o_ref[...] = acc.astype(o_ref.dtype)


def _dueling_head_kernel(x_ref, wv1_ref, bv1_ref, wv2_ref, bv2_ref,
                         wa1_ref, ba1_ref, wa2_ref, ba2_ref, o_ref,
                         *, inv_num_actions):
    """Fused dueling head: value stream, advantage stream, dueling combine."""
    x = x_ref[...]

    hv = jnp.dot(x, wv1_ref[...], preferred_element_type=jnp.float32) + bv1_ref[...]
    hv = jnp.maximum(hv, 0.0)
    # wv2 has its single real column tiled across all 128 lanes -> v is already
    # broadcast over the lane dim, no in-kernel slice needed.
    v = jnp.dot(hv.astype(wv2_ref.dtype), wv2_ref[...],
                preferred_element_type=jnp.float32) + bv2_ref[...]

    ha = jnp.dot(x, wa1_ref[...], preferred_element_type=jnp.float32) + ba1_ref[...]
    ha = jnp.maximum(ha, 0.0)
    a = jnp.dot(ha.astype(wa2_ref.dtype), wa2_ref[...],
                preferred_element_type=jnp.float32) + ba2_ref[...]

    # Padded advantage columns are exactly zero, so sum over all 128 lanes
    # equals the sum over the real actions.
    a_mean = jnp.sum(a, axis=-1, keepdims=True) * inv_num_actions
    o_ref[...] = (v + a - a_mean).astype(o_ref.dtype)


# --------------------------- pallas_call wrappers ---------------------------

def _pallas_linear(x, w, b, *, relu, compute_dtype, row_block=256):
    """y[:M,:N] = x @ w + b (+ReLU).  x:(M,K), w:(K,N), b:(N,)."""
    m, k = x.shape
    n = w.shape[1]
    k_pad = _round_up(k, 128)
    n_pad = _round_up(n, 128)
    m_pad, block_m = _m_tiling(m, row_block)
    cd = compute_dtype

    x_p = jnp.zeros((m_pad, k_pad), cd).at[:m, :k].set(x.astype(cd))
    w_p = jnp.zeros((k_pad, n_pad), cd).at[:k, :n].set(w.astype(cd))
    b_p = jnp.zeros((1, n_pad), jnp.float32).at[0, :n].set(b.astype(jnp.float32))

    out = pl.pallas_call(
        functools.partial(_linear_relu_kernel, apply_relu=relu),
        out_shape=jax.ShapeDtypeStruct((m_pad, n_pad), cd),
        grid=(m_pad // block_m,),
        in_specs=[
            pl.BlockSpec((block_m, k_pad), lambda i: (i, 0)),   # streamed rows
            pl.BlockSpec((k_pad, n_pad), lambda i: (0, 0)),     # resident weight
            pl.BlockSpec((1, n_pad), lambda i: (0, 0)),         # resident bias
        ],
        out_specs=pl.BlockSpec((block_m, n_pad), lambda i: (i, 0)),
        compiler_params=pltpu.CompilerParams(dimension_semantics=("parallel",)),
    )(x_p, w_p, b_p)
    return out[:m, :n]


def _conv_relu(x, w, b, stride, *, compute_dtype):
    """relu(conv2d(x, w, stride, VALID) + b) via im2col + Pallas matmul."""
    batch = x.shape[0]
    c_out, c_in, kh, kw = w.shape
    patches, (oh, ow) = _im2col(x, kh, kw, stride)
    w2d = jnp.transpose(w.reshape(c_out, c_in * kh * kw))      # (K, C_out)
    out = _pallas_linear(patches, w2d, b, relu=True, compute_dtype=compute_dtype)
    return out.reshape(batch, oh, ow, c_out).transpose(0, 3, 1, 2)


def _dueling_head(feat, value_params, adv_params, *, num_options, compute_dtype):
    """Fused value/advantage streams + dueling combine. feat: (B, conv_out)."""
    (wv1, bv1), (wv2, bv2) = value_params
    (wa1, ba1), (wa2, ba2) = adv_params
    b, k = feat.shape
    hidden = wv1.shape[0]
    k_pad = _round_up(k, 128)
    h_pad = _round_up(hidden, 128)
    n_pad = _round_up(max(num_options, 1), 128)
    m_pad, block_m = _m_tiling(b, 128)
    cd = compute_dtype

    x_p = jnp.zeros((m_pad, k_pad), cd).at[:b, :k].set(feat.astype(cd))

    wv1_p = jnp.zeros((k_pad, h_pad), cd).at[:k, :hidden].set(wv1.T.astype(cd))
    bv1_p = jnp.zeros((1, h_pad), jnp.float32).at[0, :hidden].set(bv1)
    wa1_p = jnp.zeros((k_pad, h_pad), cd).at[:k, :hidden].set(wa1.T.astype(cd))
    ba1_p = jnp.zeros((1, h_pad), jnp.float32).at[0, :hidden].set(ba1)

    # Value second layer: tile the single real output column across all lanes.
    wv2_t = jnp.tile(wv2.T.astype(cd), (1, n_pad))              # (hidden, n_pad)
    wv2_p = jnp.zeros((h_pad, n_pad), cd).at[:hidden, :].set(wv2_t)
    bv2_p = jnp.full((1, n_pad), bv2[0], jnp.float32)

    wa2_p = jnp.zeros((h_pad, n_pad), cd).at[:hidden, :num_options].set(wa2.T.astype(cd))
    ba2_p = jnp.zeros((1, n_pad), jnp.float32).at[0, :num_options].set(ba2)

    q = pl.pallas_call(
        functools.partial(_dueling_head_kernel, inv_num_actions=1.0 / num_options),
        out_shape=jax.ShapeDtypeStruct((m_pad, n_pad), jnp.float32),
        grid=(m_pad // block_m,),
        in_specs=[
            pl.BlockSpec((block_m, k_pad), lambda i: (i, 0)),   # streamed features
            pl.BlockSpec((k_pad, h_pad), lambda i: (0, 0)),
            pl.BlockSpec((1, h_pad), lambda i: (0, 0)),
            pl.BlockSpec((h_pad, n_pad), lambda i: (0, 0)),
            pl.BlockSpec((1, n_pad), lambda i: (0, 0)),
            pl.BlockSpec((k_pad, h_pad), lambda i: (0, 0)),
            pl.BlockSpec((1, h_pad), lambda i: (0, 0)),
            pl.BlockSpec((h_pad, n_pad), lambda i: (0, 0)),
            pl.BlockSpec((1, n_pad), lambda i: (0, 0)),
        ],
        out_specs=pl.BlockSpec((block_m, n_pad), lambda i: (i, 0)),
        compiler_params=pltpu.CompilerParams(dimension_semantics=("parallel",)),
    )(x_p, wv1_p, bv1_p, wv2_p, bv2_p, wa1_p, ba1_p, wa2_p, ba2_p)
    return q[:b, :num_options]


# --------------------------- parameters / forward ---------------------------

def _noisy_effective(p, training):
    """Effective NoisyLinear weight/bias (mirrors forward(): clamp sigma, add noise)."""
    if training:
        w = p["w_mu"] + jnp.maximum(p["w_sigma"], MIN_SIGMA) * p["w_eps"]
        b = p["b_mu"] + jnp.maximum(p["b_sigma"], MIN_SIGMA) * p["b_eps"]
    else:
        w, b = p["w_mu"], p["b_mu"]
    return w, b


@functools.partial(jax.jit, static_argnames=("num_options", "training", "compute_dtype"))
def meta_controller_forward(state, params, *, num_options, training=True,
                            compute_dtype=jnp.bfloat16):
    """MetaController.forward(state) -> Q over options, shape (B, num_options)."""
    h = state
    for name, stride in (("conv1", 4), ("conv2", 2), ("conv3", 1)):
        w, b = params[name]
        h = _conv_relu(h, w, b, stride, compute_dtype=compute_dtype)
    feat = h.reshape(h.shape[0], -1)                            # torch .view(B, -1)

    value_params = (_noisy_effective(params["value1"], training),
                    _noisy_effective(params["value2"], training))
    adv_params = (_noisy_effective(params["adv1"], training),
                  _noisy_effective(params["adv2"], training))
    return _dueling_head(feat, value_params, adv_params,
                         num_options=num_options, compute_dtype=compute_dtype)


def _init_conv(key, c_in, c_out, k):
    """Orthogonal (gain sqrt(2)) conv weight (torch layout OIHW), zero bias."""
    ortho = jax.nn.initializers.orthogonal(scale=math.sqrt(2.0))
    w = ortho(key, (c_out, c_in * k * k), jnp.float32).reshape(c_out, c_in, k, k)
    return w, jnp.zeros((c_out,), jnp.float32)


def _scale_noise(key, size):
    x = jax.random.normal(key, (size,), jnp.float32)
    return jnp.sign(x) * jnp.sqrt(jnp.abs(x))


def _init_noisy(key, in_f, out_f):
    """Mirrors NoisyLinear.reset_parameters + reset_noise (factorized Gaussian)."""
    k1, k2, k3, k4 = jax.random.split(key, 4)
    mu_range = 3.0 / math.sqrt(in_f)
    eps_in = _scale_noise(k3, in_f)
    eps_out = _scale_noise(k4, out_f)
    return dict(
        w_mu=jax.random.uniform(k1, (out_f, in_f), jnp.float32, -mu_range, mu_range),
        b_mu=jax.random.uniform(k2, (out_f,), jnp.float32, -mu_range, mu_range),
        w_sigma=jnp.full((out_f, in_f), STD_INIT / math.sqrt(in_f), jnp.float32),
        b_sigma=jnp.full((out_f,), STD_INIT / math.sqrt(out_f), jnp.float32),
        w_eps=jnp.outer(eps_out, eps_in),
        b_eps=eps_out,
    )


def init_meta_controller_params(key, state_shape, num_options):
    c, h, w = state_shape
    k1, k2, k3, k4, k5, k6, k7 = jax.random.split(key, 7)

    def osz(n, k, s):
        return (n - k) // s + 1

    oh = osz(osz(osz(h, 8, 4), 4, 2), 3, 1)
    ow = osz(osz(osz(w, 8, 4), 4, 2), 3, 1)
    conv_out = 64 * oh * ow
    return dict(
        conv1=_init_conv(k1, c, 32, 8),
        conv2=_init_conv(k2, 32, 64, 4),
        conv3=_init_conv(k3, 64, 64, 3),
        value1=_init_noisy(k4, conv_out, 512),
        value2=_init_noisy(k5, 512, 1),
        adv1=_init_noisy(k6, conv_out, 512),
        adv2=_init_noisy(k7, 512, num_options),
    )


def _reference_forward(state, params, *, num_options, training=True):
    """Pure-JAX / XLA reference (lax.conv + jnp matmuls) for correctness."""
    with jax.default_matmul_precision("highest"):
        h = state
        for name, stride in (("conv1", 4), ("conv2", 2), ("conv3", 1)):
            w, b = params[name]
            h = lax.conv_general_dilated(
                h, w, window_strides=(stride, stride), padding="VALID",
                dimension_numbers=("NCHW", "OIHW", "NCHW"))
            h = jax.nn.relu(h + b.reshape(1, -1, 1, 1))
        feat = h.reshape(h.shape[0], -1)
        wv1, bv1 = _noisy_effective(params["value1"], training)
        wv2, bv2 = _noisy_effective(params["value2"], training)
        wa1, ba1 = _noisy_effective(params["adv1"], training)
        wa2, ba2 = _noisy_effective(params["adv2"], training)
        hv = jax.nn.relu(feat @ wv1.T + bv1)
        v = hv @ wv2.T + bv2
        ha = jax.nn.relu(feat @ wa1.T + ba1)
        a = ha @ wa2.T + ba2
        return v + (a - a.mean(axis=1, keepdims=True))


if __name__ == "__main__":
    # Small shapes consistent with the module: NCHW state, 3-conv stack needs
    # H = W = 36 -> conv output 64 x 1 x 1 -> conv_out = 64.
    batch, channels, height, width = 2, 4, 36, 36
    num_options = 6

    key = jax.random.PRNGKey(0)
    k_x, k_p = jax.random.split(key)
    state = jax.random.normal(k_x, (batch, channels, height, width), jnp.float32)
    params = init_meta_controller_params(k_p, (channels, height, width), num_options)

    ref = _reference_forward(state, params, num_options=num_options, training=True)

    # f32 compute path (tight-ish check of kernel logic).
    q_f32 = meta_controller_forward(state, params, num_options=num_options,
                                    training=True, compute_dtype=jnp.float32)
    q_f32 = jax.block_until_ready(q_f32)
    assert q_f32.shape == (batch, num_options), q_f32.shape
    assert jnp.allclose(q_f32, ref, atol=5e-2, rtol=5e-2), "f32 Pallas path mismatch"

    # bf16 MXU path (performance default; f32 accumulation keeps error small).
    q_bf16 = meta_controller_forward(state, params, num_options=num_options,
                                     training=True, compute_dtype=jnp.bfloat16)
    q_bf16 = jax.block_until_ready(q_bf16)
    assert q_bf16.shape == (batch, num_options), q_bf16.shape
    assert jnp.allclose(q_bf16, ref, atol=3e-1, rtol=1e-1), "bf16 Pallas path mismatch"

    print("KERNEL_OK")
</pallas_src>

<mosaic_0001>
module attributes {stable_mosaic.version = 11 : i64} {
  func.func @_linear_relu_kernel(%arg0: i32, %arg1: memref<128x256xf32, #tpu.memory_space<vmem>>, %arg2: memref<256x128xf32, #tpu.memory_space<vmem>>, %arg3: memref<1x128xf32, #tpu.memory_space<vmem>>, %arg4: memref<128x128xf32, #tpu.memory_space<vmem>>) attributes {dimension_semantics = [#tpu.dimension_semantics<parallel>], iteration_bounds = array<i64: 1>, scalar_prefetch = 0 : i64, scratch_operands = 0 : i64, tpu.core_type = #tpu.core_type<tc>, window_params = [{transform_indices = @transform_0, window_bounds = array<i64: 128, 256>}, {pipeline_mode = #tpu.pipeline_mode<synchronous>, transform_indices = @transform_1, window_bounds = array<i64: 256, 128>}, {pipeline_mode = #tpu.pipeline_mode<synchronous>, transform_indices = @transform_2, window_bounds = array<i64: 1, 128>}, {transform_indices = @transform_3, window_bounds = array<i64: 128, 128>}]} {
    %c0 = arith.constant 0 : index
    %c0_0 = arith.constant 0 : index
    %0 = vector.load %arg1[%c0, %c0_0] : memref<128x256xf32, #tpu.memory_space<vmem>>, vector<128x256xf32>
    %c0_1 = arith.constant 0 : index
    %c0_2 = arith.constant 0 : index
    %1 = vector.load %arg2[%c0_1, %c0_2] : memref<256x128xf32, #tpu.memory_space<vmem>>, vector<256x128xf32>
    %cst = arith.constant dense<0.000000e+00> : vector<128x128xf32>
    %2 = tpu.matmul %0, %1, %cst {dimension_numbers = #tpu.dot_dimension_numbers<[1], [0], [0], [1], [0, 0, 1, 1], [], []>} : vector<128x256xf32>, vector<256x128xf32>, vector<128x128xf32> -> vector<128x128xf32>
    %c0_3 = arith.constant 0 : index
    %c0_4 = arith.constant 0 : index
    %3 = vector.load %arg3[%c0_3, %c0_4] : memref<1x128xf32, #tpu.memory_space<vmem>>, vector<1x128xf32>
    %4 = vector.broadcast %3 : vector<1x128xf32> to vector<128x128xf32>
    %5 = arith.addf %2, %4 : vector<128x128xf32>
    %cst_5 = arith.constant 0.000000e+00 : f32
    %6 = vector.broadcast %cst_5 : f32 to vector<128x128xf32>
    %7 = arith.maximumf %5, %6 : vector<128x128xf32>
    %c0_6 = arith.constant 0 : index
    %c0_7 = arith.constant 0 : index
    %8 = vector.load %arg4[%c0_6, %c0_7] : memref<128x128xf32, #tpu.memory_space<vmem>>, vector<128x128xf32>
    tpu.vector_store %arg4[%c0_6, %c0_7], %7 {strides = array<i32>} : memref<128x128xf32, #tpu.memory_space<vmem>>, vector<128x128xf32>,
    return
  }
  func.func @transform_0(%arg0: i32) -> (i32, i32) {
    %c0_i32 = arith.constant 0 : i32
    %c0_i32_0 = arith.constant 0 : i32
    return %arg0, %c0_i32 : i32, i32
  }
  func.func @transform_1(%arg0: i32) -> (i32, i32) {
    %c0_i32 = arith.constant 0 : i32
    %c0_i32_0 = arith.constant 0 : i32
    %c0_i32_1 = arith.constant 0 : i32
    return %c0_i32, %c0_i32_0 : i32, i32
  }
  func.func @transform_2(%arg0: i32) -> (i32, i32) {
    %c0_i32 = arith.constant 0 : i32
    %c0_i32_0 = arith.constant 0 : i32
    %c0_i32_1 = arith.constant 0 : i32
    return %c0_i32, %c0_i32_0 : i32, i32
  }
  func.func @transform_3(%arg0: i32) -> (i32, i32) {
    %c0_i32 = arith.constant 0 : i32
    %c0_i32_0 = arith.constant 0 : i32
    return %arg0, %c0_i32 : i32, i32
  }
}

module attributes {stable_mosaic.version = 11 : i64} {
  func.func @_linear_relu_kernel(%arg0: i32, %arg1: memref<24x512xf32, #tpu.memory_space<vmem>>, %arg2: memref<512x128xf32, #tpu.memory_space<vmem>>, %arg3: memref<1x128xf32, #tpu.memory_space<vmem>>, %arg4: memref<24x128xf32, #tpu.memory_space<vmem>>) attributes {dimension_semantics = [#tpu.dimension_semantics<parallel>], iteration_bounds = array<i64: 1>, scalar_prefetch = 0 : i64, scratch_operands = 0 : i64, tpu.core_type = #tpu.core_type<tc>, window_params = [{transform_indices = @transform_0, window_bounds = array<i64: 24, 512>}, {pipeline_mode = #tpu.pipeline_mode<synchronous>, transform_indices = @transform_1, window_bounds = array<i64: 512, 128>}, {pipeline_mode = #tpu.pipeline_mode<synchronous>, transform_indices = @transform_2, window_bounds = array<i64: 1, 128>}, {transform_indices = @transform_3, window_bounds = array<i64: 24, 128>}]} {
    %c0 = arith.constant 0 : index
    %c0_0 = arith.constant 0 : index
    %0 = vector.load %arg1[%c0, %c0_0] : memref<24x512xf32, #tpu.memory_space<vmem>>, vector<24x512xf32>
    %c0_1 = arith.constant 0 : index
    %c0_2 = arith.constant 0 : index
    %1 = vector.load %arg2[%c0_1, %c0_2] : memref<512x128xf32, #tpu.memory_space<vmem>>, vector<512x128xf32>
    %cst = arith.constant dense<0.000000e+00> : vector<24x128xf32>
    %2 = tpu.matmul %0, %1, %cst {dimension_numbers = #tpu.dot_dimension_numbers<[1], [0], [0], [1], [0, 0, 1, 1], [], []>} : vector<24x512xf32>, vector<512x128xf32>, vector<24x128xf32> -> vector<24x128xf32>
    %c0_3 = arith.constant 0 : index
    %c0_4 = arith.constant 0 : index
    %3 = vector.load %arg3[%c0_3, %c0_4] : memref<1x128xf32, #tpu.memory_space<vmem>>, vector<1x128xf32>
    %4 = vector.broadcast %3 : vector<1x128xf32> to vector<24x128xf32>
    %5 = arith.addf %2, %4 : vector<24x128xf32>
    %cst_5 = arith.constant 0.000000e+00 : f32
    %6 = vector.broadcast %cst_5 : f32 to vector<24x128xf32>
    %7 = arith.maximumf %5, %6 : vector<24x128xf32>
    %c0_6 = arith.constant 0 : index
    %c0_7 = arith.constant 0 : index
    %8 = vector.load %arg4[%c0_6, %c0_7] : memref<24x128xf32, #tpu.memory_space<vmem>>, vector<24x128xf32>
    tpu.vector_store %arg4[%c0_6, %c0_7], %7 {strides = array<i32>} : memref<24x128xf32, #tpu.memory_space<vmem>>, vector<24x128xf32>,
    return
  }
  func.func @transform_0(%arg0: i32) -> (i32, i32) {
    %c0_i32 = arith.constant 0 : i32
    %c0_i32_0 = arith.constant 0 : i32
    return %arg0, %c0_i32 : i32, i32
  }
  func.func @transform_1(%arg0: i32) -> (i32, i32) {
    %c0_i32 = arith.constant 0 : i32
    %c0_i32_0 = arith.constant 0 : i32
    %c0_i32_1 = arith.constant 0 : i32
    return %c0_i32, %c0_i32_0 : i32, i32
  }
  func.func @transform_2(%arg0: i32) -> (i32, i32) {
    %c0_i32 = arith.constant 0 : i32
    %c0_i32_0 = arith.constant 0 : i32
    %c0_i32_1 = arith.constant 0 : i32
    return %c0_i32, %c0_i32_0 : i32, i32
  }
  func.func @transform_3(%arg0: i32) -> (i32, i32) {
    %c0_i32 = arith.constant 0 : i32
    %c0_i32_0 = arith.constant 0 : i32
    return %arg0, %c0_i32 : i32, i32
  }
}

module attributes {stable_mosaic.version = 11 : i64} {
  func.func @_linear_relu_kernel(%arg0: i32, %arg1: memref<8x640xf32, #tpu.memory_space<vmem>>, %arg2: memref<640x128xf32, #tpu.memory_space<vmem>>, %arg3: memref<1x128xf32, #tpu.memory_space<vmem>>, %arg4: memref<8x128xf32, #tpu.memory_space<vmem>>) attributes {dimension_semantics = [#tpu.dimension_semantics<parallel>], iteration_bounds = array<i64: 1>, scalar_prefetch = 0 : i64, scratch_operands = 0 : i64, tpu.core_type = #tpu.core_type<tc>, window_params = [{transform_indices = @transform_0, window_bounds = array<i64: 8, 640>}, {pipeline_mode = #tpu.pipeline_mode<synchronous>, transform_indices = @transform_1, window_bounds = array<i64: 640, 128>}, {pipeline_mode = #tpu.pipeline_mode<synchronous>, transform_indices = @transform_2, window_bounds = array<i64: 1, 128>}, {transform_indices = @transform_3, window_bounds = array<i64: 8, 128>}]} {
    %c0 = arith.constant 0 : index
    %c0_0 = arith.constant 0 : index
    %0 = vector.load %arg1[%c0, %c0_0] : memref<8x640xf32, #tpu.memory_space<vmem>>, vector<8x640xf32>
    %c0_1 = arith.constant 0 : index
    %c0_2 = arith.constant 0 : index
    %1 = vector.load %arg2[%c0_1, %c0_2] : memref<640x128xf32, #tpu.memory_space<vmem>>, vector<640x128xf32>
    %cst = arith.constant dense<0.000000e+00> : vector<8x128xf32>
    %2 = tpu.matmul %0, %1, %cst {dimension_numbers = #tpu.dot_dimension_numbers<[1], [0], [0], [1], [0, 0, 1, 1], [], []>} : vector<8x640xf32>, vector<640x128xf32>, vector<8x128xf32> -> vector<8x128xf32>
    %c0_3 = arith.constant 0 : index
    %c0_4 = arith.constant 0 : index
    %3 = vector.load %arg3[%c0_3, %c0_4] : memref<1x128xf32, #tpu.memory_space<vmem>>, vector<1x128xf32>
    %4 = vector.broadcast %3 : vector<1x128xf32> to vector<8x128xf32>
    %5 = arith.addf %2, %4 : vector<8x128xf32>
    %cst_5 = arith.constant 0.000000e+00 : f32
    %6 = vector.broadcast %cst_5 : f32 to vector<8x128xf32>
    %7 = arith.maximumf %5, %6 : vector<8x128xf32>
    %c0_6 = arith.constant 0 : index
    %c0_7 = arith.constant 0 : index
    %8 = vector.load %arg4[%c0_6, %c0_7] : memref<8x128xf32, #tpu.memory_space<vmem>>, vector<8x128xf32>
    tpu.vector_store %arg4[%c0_6, %c0_7], %7 {strides = array<i32>} : memref<8x128xf32, #tpu.memory_space<vmem>>, vector<8x128xf32>,
    return
  }
  func.func @transform_0(%arg0: i32) -> (i32, i32) {
    %c0_i32 = arith.constant 0 : i32
    %c0_i32_0 = arith.constant 0 : i32
    return %arg0, %c0_i32 : i32, i32
  }
  func.func @transform_1(%arg0: i32) -> (i32, i32) {
    %c0_i32 = arith.constant 0 : i32
    %c0_i32_0 = arith.constant 0 : i32
    %c0_i32_1 = arith.constant 0 : i32
    return %c0_i32, %c0_i32_0 : i32, i32
  }
  func.func @transform_2(%arg0: i32) -> (i32, i32) {
    %c0_i32 = arith.constant 0 : i32
    %c0_i32_0 = arith.constant 0 : i32
    %c0_i32_1 = arith.constant 0 : i32
    return %c0_i32, %c0_i32_0 : i32, i32
  }
  func.func @transform_3(%arg0: i32) -> (i32, i32) {
    %c0_i32 = arith.constant 0 : i32
    %c0_i32_0 = arith.constant 0 : i32
    return %arg0, %c0_i32 : i32, i32
  }
}

module attributes {stable_mosaic.version = 11 : i64} {
  func.func @_dueling_head_kernel(%arg0: i32, %arg1: memref<8x128xf32, #tpu.memory_space<vmem>>, %arg2: memref<128x512xf32, #tpu.memory_space<vmem>>, %arg3: memref<1x512xf32, #tpu.memory_space<vmem>>, %arg4: memref<512x128xf32, #tpu.memory_space<vmem>>, %arg5: memref<1x128xf32, #tpu.memory_space<vmem>>, %arg6: memref<128x512xf32, #tpu.memory_space<vmem>>, %arg7: memref<1x512xf32, #tpu.memory_space<vmem>>, %arg8: memref<512x128xf32, #tpu.memory_space<vmem>>, %arg9: memref<1x128xf32, #tpu.memory_space<vmem>>, %arg10: memref<8x128xf32, #tpu.memory_space<vmem>>) attributes {dimension_semantics = [#tpu.dimension_semantics<parallel>], iteration_bounds = array<i64: 1>, scalar_prefetch = 0 : i64, scratch_operands = 0 : i64, tpu.core_type = #tpu.core_type<tc>, window_params = [{transform_indices = @transform_0, window_bounds = array<i64: 8, 128>}, {pipeline_mode = #tpu.pipeline_mode<synchronous>, transform_indices = @transform_1, window_bounds = array<i64: 128, 512>}, {pipeline_mode = #tpu.pipeline_mode<synchronous>, transform_indices = @transform_2, window_bounds = array<i64: 1, 512>}, {pipeline_mode = #tpu.pipeline_mode<synchronous>, transform_indices = @transform_3, window_bounds = array<i64: 512, 128>}, {pipeline_mode = #tpu.pipeline_mode<synchronous>, transform_indices = @transform_4, window_bounds = array<i64: 1, 128>}, {pipeline_mode = #tpu.pipeline_mode<synchronous>, transform_indices = @transform_5, window_bounds = array<i64: 128, 512>}, {pipeline_mode = #tpu.pipeline_mode<synchronous>, transform_indices = @transform_6, window_bounds = array<i64: 1, 512>}, {pipeline_mode = #tpu.pipeline_mode<synchronous>, transform_indices = @transform_7, window_bounds = array<i64: 512, 128>}, {pipeline_mode = #tpu.pipeline_mode<synchronous>, transform_indices = @transform_8, window_bounds = array<i64: 1, 128>}, {transform_indices = @transform_9, window_bounds = array<i64: 8, 128>}]} {
    %c0 = arith.constant 0 : index
    %c0_0 = arith.constant 0 : index
    %0 = vector.load %arg1[%c0, %c0_0] : memref<8x128xf32, #tpu.memory_space<vmem>>, vector<8x128xf32>
    %c0_1 = arith.constant 0 : index
    %c0_2 = arith.constant 0 : index
    %1 = vector.load %arg2[%c0_1, %c0_2] : memref<128x512xf32, #tpu.memory_space<vmem>>, vector<128x512xf32>
    %cst = arith.constant dense<0.000000e+00> : vector<8x512xf32>
    %2 = tpu.matmul %0, %1, %cst {dimension_numbers = #tpu.dot_dimension_numbers<[1], [0], [0], [1], [0, 0, 1, 1], [], []>} : vector<8x128xf32>, vector<128x512xf32>, vector<8x512xf32> -> vector<8x512xf32>
    %c0_3 = arith.constant 0 : index
    %c0_4 = arith.constant 0 : index
    %3 = vector.load %arg3[%c0_3, %c0_4] : memref<1x512xf32, #tpu.memory_space<vmem>>, vector<1x512xf32>
    %4 = vector.broadcast %3 : vector<1x512xf32> to vector<8x512xf32>
    %5 = arith.addf %2, %4 : vector<8x512xf32>
    %cst_5 = arith.constant 0.000000e+00 : f32
    %6 = vector.broadcast %cst_5 : f32 to vector<8x512xf32>
    %7 = arith.maximumf %5, %6 : vector<8x512xf32>
    %c0_6 = arith.constant 0 : index
    %c0_7 = arith.constant 0 : index
    %8 = vector.load %arg4[%c0_6, %c0_7] : memref<512x128xf32, #tpu.memory_space<vmem>>, vector<512x128xf32>
    %cst_8 = arith.constant dense<0.000000e+00> : vector<8x128xf32>
    %9 = tpu.matmul %7, %8, %cst_8 {dimension_numbers = #tpu.dot_dimension_numbers<[1], [0], [0], [1], [0, 0, 1, 1], [], []>} : vector<8x512xf32>, vector<512x128xf32>, vector<8x128xf32> -> vector<8x128xf32>
    %c0_9 = arith.constant 0 : index
    %c0_10 = arith.constant 0 : index
    %10 = vector.load %arg5[%c0_9, %c0_10] : memref<1x128xf32, #tpu.memory_space<vmem>>, vector<1x128xf32>
    %11 = vector.broadcast %10 : vector<1x128xf32> to vector<8x128xf32>
    %12 = arith.addf %9, %11 : vector<8x128xf32>
    %c0_11 = arith.constant 0 : index
    %c0_12 = arith.constant 0 : index
    %13 = vector.load %arg6[%c0_11, %c0_12] : memref<128x512xf32, #tpu.memory_space<vmem>>, vector<128x512xf32>
    %cst_13 = arith.constant dense<0.000000e+00> : vector<8x512xf32>
    %14 = tpu.matmul %0, %13, %cst_13 {dimension_numbers = #tpu.dot_dimension_numbers<[1], [0], [0], [1], [0, 0, 1, 1], [], []>} : vector<8x128xf32>, vector<128x512xf32>, vector<8x512xf32> -> vector<8x512xf32>
    %c0_14 = arith.constant 0 : index
    %c0_15 = arith.constant 0 : index
    %15 = vector.load %arg7[%c0_14, %c0_15] : memref<1x512xf32, #tpu.memory_space<vmem>>, vector<1x512xf32>
    %16 = vector.broadcast %15 : vector<1x512xf32> to vector<8x512xf32>
    %17 = arith.addf %14, %16 : vector<8x512xf32>
    %cst_16 = arith.constant 0.000000e+00 : f32
    %18 = vector.broadcast %cst_16 : f32 to vector<8x512xf32>
    %19 = arith.maximumf %17, %18 : vector<8x512xf32>
    %c0_17 = arith.constant 0 : index
    %c0_18 = arith.constant 0 : index
    %20 = vector.load %arg8[%c0_17, %c0_18] : memref<512x128xf32, #tpu.memory_space<vmem>>, vector<512x128xf32>
    %cst_19 = arith.constant dense<0.000000e+00> : vector<8x128xf32>
    %21 = tpu.matmul %19, %20, %cst_19 {dimension_numbers = #tpu.dot_dimension_numbers<[1], [0], [0], [1], [0, 0, 1, 1], [], []>} : vector<8x512xf32>, vector<512x128xf32>, vector<8x128xf32> -> vector<8x128xf32>
    %c0_20 = arith.constant 0 : index
    %c0_21 = arith.constant 0 : index
    %22 = vector.load %arg9[%c0_20, %c0_21] : memref<1x128xf32, #tpu.memory_space<vmem>>, vector<1x128xf32>
    %23 = vector.broadcast %22 : vector<1x128xf32> to vector<8x128xf32>
    %24 = arith.addf %21, %23 : vector<8x128xf32>
    %cst_22 = arith.constant dense<0.000000e+00> : vector<8xf32>
    %25 = vector.multi_reduction <add>, %24, %cst_22 [1] : vector<8x128xf32> to vector<8xf32>
    %26 = vector.shape_cast %25 : vector<8xf32> to vector<8x1xf32>
    %cst_23 = arith.constant 0.166666672 : f32
    %27 = vector.broadcast %cst_23 : f32 to vector<8x1xf32>
    %28 = arith.mulf %26, %27 : vector<8x1xf32>
    %29 = arith.addf %12, %24 : vector<8x128xf32>
    %30 = vector.broadcast %28 : vector<8x1xf32> to vector<8x128xf32>
    %31 = arith.subf %29, %30 : vector<8x128xf32>
    %c0_24 = arith.constant 0 : index
    %c0_25 = arith.constant 0 : index
    %32 = vector.load %arg10[%c0_24, %c0_25] : memref<8x128xf32, #tpu.memory_space<vmem>>, vector<8x128xf32>
    tpu.vector_store %arg10[%c0_24, %c0_25], %31 {strides = array<i32>} : memref<8x128xf32, #tpu.memory_space<vmem>>, vector<8x128xf32>,
    return
  }
  func.func @transform_0(%arg0: i32) -> (i32, i32) {
    %c0_i32 = arith.constant 0 : i32
    %c0_i32_0 = arith.constant 0 : i32
    return %arg0, %c0_i32 : i32, i32
  }
  func.func @transform_1(%arg0: i32) -> (i32, i32) {
    %c0_i32 = arith.constant 0 : i32
    %c0_i32_0 = arith.constant 0 : i32
    %c0_i32_1 = arith.constant 0 : i32
    return %c0_i32, %c0_i32_0 : i32, i32
  }
  func.func @transform_2(%arg0: i32) -> (i32, i32) {
    %c0_i32 = arith.constant 0 : i32
    %c0_i32_0 = arith.constant 0 : i32
    %c0_i32_1 = arith.constant 0 : i32
    return %c0_i32, %c0_i32_0 : i32, i32
  }
  func.func @transform_3(%arg0: i32) -> (i32, i32) {
    %c0_i32 = arith.constant 0 : i32
    %c0_i32_0 = arith.constant 0 : i32
    %c0_i32_1 = arith.constant 0 : i32
    return %c0_i32, %c0_i32_0 : i32, i32
  }
  func.func @transform_4(%arg0: i32) -> (i32, i32) {
    %c0_i32 = arith.constant 0 : i32
    %c0_i32_0 = arith.constant 0 : i32
    %c0_i32_1 = arith.constant 0 : i32
    return %c0_i32, %c0_i32_0 : i32, i32
  }
  func.func @transform_5(%arg0: i32) -> (i32, i32) {
    %c0_i32 = arith.constant 0 : i32
    %c0_i32_0 = arith.constant 0 : i32
    %c0_i32_1 = arith.constant 0 : i32
    return %c0_i32, %c0_i32_0 : i32, i32
  }
  func.func @transform_6(%arg0: i32) -> (i32, i32) {
    %c0_i32 = arith.constant 0 : i32
    %c0_i32_0 = arith.constant 0 : i32
    %c0_i32_1 = arith.constant 0 : i32
    return %c0_i32, %c0_i32_0 : i32, i32
  }
  func.func @transform_7(%arg0: i32) -> (i32, i32) {
    %c0_i32 = arith.constant 0 : i32
    %c0_i32_0 = arith.constant 0 : i32
    %c0_i32_1 = arith.constant 0 : i32
    return %c0_i32, %c0_i32_0 : i32, i32
  }
  func.func @transform_8(%arg0: i32) -> (i32, i32) {
    %c0_i32 = arith.constant 0 : i32
    %c0_i32_0 = arith.constant 0 : i32
    %c0_i32_1 = arith.constant 0 : i32
    return %c0_i32, %c0_i32_0 : i32, i32
  }
  func.func @transform_9(%arg0: i32) -> (i32, i32) {
    %c0_i32 = arith.constant 0 : i32
    %c0_i32_0 = arith.constant 0 : i32
    return %arg0, %c0_i32 : i32, i32
  }
}

</mosaic_0001>

<llo_original>
// kernel: meta_controller_forward.4
$region0: #{meta_controller_forward.4}
  #allocation0 [shape = 'u32[]', space=smem, size = 0x4, offset = 0x4, fixed_abs, tag = 'smem constant byte address 0x4 - core index']
  #allocation1 [shape = 'u32[72,128]{1,0:T(1,128)}', space=vmem, size = 0x9000, scoped, tag = 'internal scratch']
  %s0 = inlined_call_operand.vmem [shape: f32[128,256], index: 0, kind: input, shape index: {}]
  %s1 = inlined_call_operand.vmem [shape: f32[256,128], index: 1, kind: input, shape index: {}]
  %s2 = inlined_call_operand.vmem [shape: f32[1,128], index: 2, kind: input, shape index: {}]
  %s3 = inlined_call_operand.vmem [shape: f32[128,128], index: 3, kind: output, shape index: {}]
  %s4 = sld [smem:[#allocation0]]
  $region22: #{meta_controller_forward.4} parent=0
    _
  %s6 = ssub.s32 1, %s4
  %s7 = scalar_select 0, %s6, %s4
  // Predicated region
  $region2: #{meta_controller_forward.4} parent=0 // pred_check
    _
  $region3: #{meta_controller_forward.4} parent=0 // pred_check_branch
    %9 = sbr.rel (0) target = $region5
  $region4: #{meta_controller_forward.4} parent=0 // pred_region
    _
  $region5: #{meta_controller_forward.4} parent=0 // pred_fallthru
    _
  // Predicated region
  $region6: #{meta_controller_forward.4} parent=0 // pred_check
    _
  $region7: #{meta_controller_forward.4} parent=0 // pred_check_branch
    %11 = sbr.rel (0) target = $region9
  $region8: #{meta_controller_forward.4} parent=0 // pred_region
    _
  $region9: #{meta_controller_forward.4} parent=0 // pred_fallthru
    _
  // Predicated region
  $region10: #{meta_controller_forward.4} parent=0 // pred_check
    _
  $region11: #{meta_controller_forward.4} parent=0 // pred_check_branch
    %13 = sbr.rel (0) target = $region13
  $region12: #{meta_controller_forward.4} parent=0 // pred_region
    _
  $region13: #{meta_controller_forward.4} parent=0 // pred_fallthru
    _
  %v14 = vld [vmem:[%s0] sm:$0xff]
  %v15 = vld [vmem:[%s0 + $0x8] sm:$0xff]
  %v16 = vld [vmem:[%s0 + $0x10] sm:$0xff]
  %v17 = vld [vmem:[%s0 + $0x18] sm:$0xff]
  %v18 = vld [vmem:[%s0 + $0x20] sm:$0xff]
  %v19 = vld [vmem:[%s0 + $0x28] sm:$0xff]
  %v20 = vld [vmem:[%s0 + $0x30] sm:$0xff]
  %v21 = vld [vmem:[%s0 + $0x38] sm:$0xff]
  %v22 = vld [vmem:[%s0 + $0x40] sm:$0xff]
  %v23 = vld [vmem:[%s0 + $0x48] sm:$0xff]
  %v24 = vld [vmem:[%s0 + $0x50] sm:$0xff]
  %v25 = vld [vmem:[%s0 + $0x58] sm:$0xff]
  %v26 = vld [vmem:[%s0 + $0x60] sm:$0xff]
  %v27 = vld [vmem:[%s0 + $0x68] sm:$0xff]
  %v28 = vld [vmem:[%s0 + $0x70] sm:$0xff]
  %v29 = vld [vmem:[%s0 + $0x78] sm:$0xff]
  %v30 = vld [vmem:[%s0 + $0x80] sm:$0xff]
  %v31 = vld [vmem:[%s0 + $0x88] sm:$0xff]
  %v32 = vld [vmem:[%s0 + $0x90] sm:$0xff]
  %v33 = vld [vmem:[%s0 + $0x98] sm:$0xff]
  %v34 = vld [vmem:[%s0 + $0xa0] sm:$0xff]
  %v35 = vld [vmem:[%s0 + $0xa8] sm:$0xff]
  %v36 = vld [vmem:[%s0 + $0xb0] sm:$0xff]
  %v37 = vld [vmem:[%s0 + $0xb8] sm:$0xff]
  %v38 = vld [vmem:[%s0 + $0xc0] sm:$0xff]
  %v39 = vld [vmem:[%s0 + $0xc8] sm:$0xff]
  %v40 = vld [vmem:[%s0 + $0xd0] sm:$0xff]
  %v41 = vld [vmem:[%s0 + $0xd8] sm:$0xff]
  %v42 = vld [vmem:[%s0 + $0xe0] sm:$0xff]
  %v43 = vld [vmem:[%s0 + $0xe8] sm:$0xff]
  %v44 = vld [vmem:[%s0 + $0xf0] sm:$0xff]
  %v45 = vld [vmem:[%s0 + $0xf8] sm:$0xff]
  %v46 = vld [vmem:[%s1] sm:$0xff]
  %v47 = vld [vmem:[%s1 + $0x8] sm:$0xff]
  %v48 = vld [vmem:[%s1 + $0x10] sm:$0xff]
  %v49 = vld [vmem:[%s1 + $0x18] sm:$0xff]
  %v50 = vld [vmem:[%s1 + $0x20] sm:$0xff]
  %v51 = vld [vmem:[%s1 + $0x28] sm:$0xff]
  %v52 = vld [vmem:[%s1 + $0x30] sm:$0xff]
  %v53 = vld [vmem:[%s1 + $0x38] sm:$0xff]
  %v54 = vld [vmem:[%s1 + $0x40] sm:$0xff]
  %v55 = vld [vmem:[%s1 + $0x48] sm:$0xff]
  %v56 = vld [vmem:[%s1 + $0x50] sm:$0xff]
  %v57 = vld [vmem:[%s1 + $0x58] sm:$0xff]
  %v58 = vld [vmem:[%s1 + $0x60] sm:$0xff]
  %v59 = vld [vmem:[%s1 + $0x68] sm:$0xff]
  %v60 = vld [vmem:[%s1 + $0x70] sm:$0xff]
  %v61 = vld [vmem:[%s1 + $0x78] sm:$0xff]
  %v62 = vld [vmem:[%s1 + $0x80] sm:$0xff]
  %v63 = vld [vmem:[%s1 + $0x88] sm:$0xff]
  %v64 = vld [vmem:[%s1 + $0x90] sm:$0xff]
  %v65 = vld [vmem:[%s1 + $0x98] sm:$0xff]
  %v66 = vld [vmem:[%s1 + $0xa0] sm:$0xff]
  %v67 = vld [vmem:[%s1 + $0xa8] sm:$0xff]
  %v68 = vld [vmem:[%s1 + $0xb0] sm:$0xff]
  %v69 = vld [vmem:[%s1 + $0xb8] sm:$0xff]
  %v70 = vld [vmem:[%s1 + $0xc0] sm:$0xff]
  %v71 = vld [vmem:[%s1 + $0xc8] sm:$0xff]
  %v72 = vld [vmem:[%s1 + $0xd0] sm:$0xff]
  %v73 = vld [vmem:[%s1 + $0xd8] sm:$0xff]
  %v74 = vld [vmem:[%s1 + $0xe0] sm:$0xff]
  %v75 = vld [vmem:[%s1 + $0xe8] sm:$0xff]
  %v76 = vld [vmem:[%s1 + $0xf0] sm:$0xff]
  %v77 = vld [vmem:[%s1 + $0xf8] sm:$0xff]
  %v78 = vld [vmem:[%s2] sm:$0x1]
  %v80 = vperm.slane %v78, 0
  %82 = vmatpush.msra.mxu0 %v61
  %83 = vmatpush.msra.mxu0 %v60
  %84 = vmatpush.msra.mxu0 %v59
  %85 = vmatpush.msra.mxu0 %v58
  %86 = vmatpush.msra.mxu0 %v57
  %87 = vmatpush.msra.mxu0 %v56
  %88 = vmatpush.msra.mxu0 %v55
  %89 = vmatpush.msra.mxu0 %v54
  %90 = vmatpush.msra.mxu0 %v53
  %91 = vmatpush.msra.mxu0 %v52
  %92 = vmatpush.msra.mxu0 %v51
  %93 = vmatpush.msra.mxu0 %v50
  %94 = vmatpush.msra.mxu0 %v49
  %95 = vmatpush.msra.mxu0 %v48
  %96 = vmatpush.msra.mxu0 %v47
  %97 = vmatpush.msra.mxu0 %v46
  %98 = vmatmul.f32.gmra.mxu0 %v14
  %v99 = vpop.f32.mrf.mxu0
  %v100 = vadd.f32 %v80, %v99
  %101 = vmatmul.f32.gmra.mxu0 %v16
  %v102 = vpop.f32.mrf.mxu0
  %v103 = vadd.f32 %v80, %v102
  %104 = vmatmul.f32.gmra.mxu0 %v18
  %v105 = vpop.f32.mrf.mxu0
  %v106 = vadd.f32 %v80, %v105
  %107 = vmatmul.f32.gmra.mxu0 %v20
  %v108 = vpop.f32.mrf.mxu0
  %v109 = vadd.f32 %v80, %v108
  %110 = vmatmul.f32.gmra.mxu0 %v22
  %v111 = vpop.f32.mrf.mxu0
  %v112 = vadd.f32 %v80, %v111
  %113 = vmatmul.f32.gmra.mxu0 %v24
  %v114 = vpop.f32.mrf.mxu0
  %v115 = vadd.f32 %v80, %v114
  %116 = vmatmul.f32.gmra.mxu0 %v26
  %v117 = vpop.f32.mrf.mxu0
  %v118 = vadd.f32 %v80, %v117
  %119 = vmatmul.f32.gmra.mxu0 %v28
  %v120 = vpop.f32.mrf.mxu0
  %v121 = vadd.f32 %v80, %v120
  %122 = vmatmul.f32.gmra.mxu0 %v30
  %v123 = vpop.f32.mrf.mxu0
  %v124 = vadd.f32 %v80, %v123
  %125 = vmatmul.f32.gmra.mxu0 %v32
  %v126 = vpop.f32.mrf.mxu0
  %v127 = vadd.f32 %v80, %v126
  %128 = vmatmul.f32.gmra.mxu0 %v34
  %v129 = vpop.f32.mrf.mxu0
  %v130 = vadd.f32 %v80, %v129
  %131 = vmatmul.f32.gmra.mxu0 %v36
  %v132 = vpop.f32.mrf.mxu0
  %v133 = vadd.f32 %v80, %v132
  %134 = vmatmul.f32.gmra.mxu0 %v38
  %v135 = vpop.f32.mrf.mxu0
  %v136 = vadd.f32 %v80, %v135
  %137 = vmatmul.f32.gmra.mxu0 %v40
  %v138 = vpop.f32.mrf.mxu0
  %v139 = vadd.f32 %v80, %v138
  %140 = vmatmul.f32.gmra.mxu0 %v42
  %v141 = vpop.f32.mrf.mxu0
  %v142 = vadd.f32 %v80, %v141
  %143 = vmatmul.f32.gmra.mxu0 %v44
  %v144 = vpop.f32.mrf.mxu0
  %v145 = vadd.f32 %v80, %v144
  %146 = vdwg.mxu0
  %147 = vmatpush.msra.mxu0 %v77
  %148 = vmatpush.msra.mxu0 %v76
  %149 = vmatpush.msra.mxu0 %v75
  %150 = vmatpush.msra.mxu0 %v74
  %151 = vmatpush.msra.mxu0 %v73
  %152 = vmatpush.msra.mxu0 %v72
  %153 = vmatpush.msra.mxu0 %v71
  %154 = vmatpush.msra.mxu0 %v70
  %155 = vmatpush.msra.mxu0 %v69
  %156 = vmatpush.msra.mxu0 %v68
  %157 = vmatpush.msra.mxu0 %v67
  %158 = vmatpush.msra.mxu0 %v66
  %159 = vmatpush.msra.mxu0 %v65
  %160 = vmatpush.msra.mxu0 %v64
  %161 = vmatpush.msra.mxu0 %v63
  %162 = vmatpush.msra.mxu0 %v62
  %163 = vmatmul.f32.gmra.mxu0 %v15
  %v164 = vpop.f32.mrf.mxu0
  %v165 = vadd.f32 %v100, %v164
  %166 = vmatmul.f32.gmra.mxu0 %v17
  %v167 = vpop.f32.mrf.mxu0
  %v168 = vadd.f32 %v103, %v167
  %169 = vmatmul.f32.gmra.mxu0 %v19
  %v170 = vpop.f32.mrf.mxu0
  %v171 = vadd.f32 %v106, %v170
  %172 = vmatmul.f32.gmra.mxu0 %v21
  %v173 = vpop.f32.mrf.mxu0
  %v174 = vadd.f32 %v109, %v173
  %175 = vmatmul.f32.gmra.mxu0 %v23
  %v176 = vpop.f32.mrf.mxu0
  %v177 = vadd.f32 %v112, %v176
  %178 = vmatmul.f32.gmra.mxu0 %v25
  %v179 = vpop.f32.mrf.mxu0
  %v180 = vadd.f32 %v115, %v179
  %181 = vmatmul.f32.gmra.mxu0 %v27
  %v182 = vpop.f32.mrf.mxu0
  %v183 = vadd.f32 %v118, %v182
  %184 = vmatmul.f32.gmra.mxu0 %v29
  %v185 = vpop.f32.mrf.mxu0
  %v186 = vadd.f32 %v121, %v185
  %187 = vmatmul.f32.gmra.mxu0 %v31
  %v188 = vpop.f32.mrf.mxu0
  %v189 = vadd.f32 %v124, %v188
  %190 = vmatmul.f32.gmra.mxu0 %v33
  %v191 = vpop.f32.mrf.mxu0
  %v192 = vadd.f32 %v127, %v191
  %193 = vmatmul.f32.gmra.mxu0 %v35
  %v194 = vpop.f32.mrf.mxu0
  %v195 = vadd.f32 %v130, %v194
  %196 = vmatmul.f32.gmra.mxu0 %v37
  %v197 = vpop.f32.mrf.mxu0
  %v198 = vadd.f32 %v133, %v197
  %199 = vmatmul.f32.gmra.mxu0 %v39
  %v200 = vpop.f32.mrf.mxu0
  %v201 = vadd.f32 %v136, %v200
  %202 = vmatmul.f32.gmra.mxu0 %v41
  %v203 = vpop.f32.mrf.mxu0
  %v204 = vadd.f32 %v139, %v203
  %205 = vmatmul.f32.gmra.mxu0 %v43
  %v206 = vpop.f32.mrf.mxu0
  %v207 = vadd.f32 %v142, %v206
  %208 = vmatmul.f32.gmra.mxu0 %v45
  %v209 = vpop.f32.mrf.mxu0
  %v210 = vadd.f32 %v145, %v209
  %211 = vdwg.mxu0
  %v212 = vmax.f32 %v165, 0.0
  %v213 = vmax.f32 %v168, 0.0
  %v214 = vmax.f32 %v171, 0.0
  %v215 = vmax.f32 %v174, 0.0
  %v216 = vmax.f32 %v177, 0.0
  %v217 = vmax.f32 %v180, 0.0
  %v218 = vmax.f32 %v183, 0.0
  %v219 = vmax.f32 %v186, 0.0
  %v220 = vmax.f32 %v189, 0.0
  %v221 = vmax.f32 %v192, 0.0
  %v222 = vmax.f32 %v195, 0.0
  %v223 = vmax.f32 %v198, 0.0
  %v224 = vmax.f32 %v201, 0.0
  %v225 = vmax.f32 %v204, 0.0
  %v226 = vmax.f32 %v207, 0.0
  %v227 = vmax.f32 %v210, 0.0
  %228 = vst [vmem:[%s3] sm:$0xff] %v212
  %229 = vst [vmem:[%s3 + $0x8] sm:$0xff] %v213
  %230 = vst [vmem:[%s3 + $0x10] sm:$0xff] %v214
  %231 = vst [vmem:[%s3 + $0x18] sm:$0xff] %v215
  %232 = vst [vmem:[%s3 + $0x20] sm:$0xff] %v216
  %233 = vst [vmem:[%s3 + $0x28] sm:$0xff] %v217
  %234 = vst [vmem:[%s3 + $0x30] sm:$0xff] %v218
  %235 = vst [vmem:[%s3 + $0x38] sm:$0xff] %v219
  %236 = vst [vmem:[%s3 + $0x40] sm:$0xff] %v220
  %237 = vst [vmem:[%s3 + $0x48] sm:$0xff] %v221
  %238 = vst [vmem:[%s3 + $0x50] sm:$0xff] %v222
  %239 = vst [vmem:[%s3 + $0x58] sm:$0xff] %v223
  %240 = vst [vmem:[%s3 + $0x60] sm:$0xff] %v224
  %241 = vst [vmem:[%s3 + $0x68] sm:$0xff] %v225
  %242 = vst [vmem:[%s3 + $0x70] sm:$0xff] %v226
  %243 = vst [vmem:[%s3 + $0x78] sm:$0xff] %v227
  // Predicated region
  $region14: #{meta_controller_forward.4} parent=0 // pred_check
    _
  $region15: #{meta_controller_forward.4} parent=0 // pred_check_branch
    %245 = sbr.rel (0) target = $region17
  $region16: #{meta_controller_forward.4} parent=0 // pred_region
    _
  $region17: #{meta_controller_forward.4} parent=0 // pred_fallthru
    _
  // Predicated region
  $region18: #{meta_controller_forward.4} parent=0 // pred_check
    _
  $region19: #{meta_controller_forward.4} parent=0 // pred_check_branch
    %247 = sbr.rel (0) target = $region21
  $region20: #{meta_controller_forward.4} parent=0 // pred_region
    _
  $region21: #{meta_controller_forward.4} parent=0 // pred_fallthru
    _

// kernel: meta_controller_forward.5
$region0: #{meta_controller_forward.5}
  #allocation0 [shape = 'u32[]', space=smem, size = 0x4, offset = 0x4, fixed_abs, tag = 'smem constant byte address 0x4 - core index']
  #allocation1 [shape = 'u32[72,128]{1,0:T(1,128)}', space=vmem, size = 0x9000, scoped, tag = 'internal scratch']
  %s0 = inlined_call_operand.vmem [shape: f32[24,512], index: 0, kind: input, shape index: {}]
  %s1 = inlined_call_operand.vmem [shape: f32[512,128], index: 1, kind: input, shape index: {}]
  %s2 = inlined_call_operand.vmem [shape: f32[1,128], index: 2, kind: input, shape index: {}]
  %s3 = inlined_call_operand.vmem [shape: f32[24,128], index: 3, kind: output, shape index: {}]
  %s4 = sld [smem:[#allocation0]]
  $region22: #{meta_controller_forward.5} parent=0
    _
  %s6 = ssub.s32 1, %s4
  %s7 = scalar_select 0, %s6, %s4
  // Predicated region
  $region2: #{meta_controller_forward.5} parent=0 // pred_check
    _
  $region3: #{meta_controller_forward.5} parent=0 // pred_check_branch
    %9 = sbr.rel (0) target = $region5
  $region4: #{meta_controller_forward.5} parent=0 // pred_region
    _
  $region5: #{meta_controller_forward.5} parent=0 // pred_fallthru
    _
  // Predicated region
  $region6: #{meta_controller_forward.5} parent=0 // pred_check
    _
  $region7: #{meta_controller_forward.5} parent=0 // pred_check_branch
    %11 = sbr.rel (0) target = $region9
  $region8: #{meta_controller_forward.5} parent=0 // pred_region
    _
  $region9: #{meta_controller_forward.5} parent=0 // pred_fallthru
    _
  // Predicated region
  $region10: #{meta_controller_forward.5} parent=0 // pred_check
    _
  $region11: #{meta_controller_forward.5} parent=0 // pred_check_branch
    %13 = sbr.rel (0) target = $region13
  $region12: #{meta_controller_forward.5} parent=0 // pred_region
    _
  $region13: #{meta_controller_forward.5} parent=0 // pred_fallthru
    _
  %v14 = vld [vmem:[%s0] sm:$0xff]
  %v15 = vld [vmem:[%s0 + $0x8] sm:$0xff]
  %v16 = vld [vmem:[%s0 + $0x10] sm:$0xff]
  %v17 = vld [vmem:[%s0 + $0x18] sm:$0xff]
  %v18 = vld [vmem:[%s0 + $0x20] sm:$0xff]
  %v19 = vld [vmem:[%s0 + $0x28] sm:$0xff]
  %v20 = vld [vmem:[%s0 + $0x30] sm:$0xff]
  %v21 = vld [vmem:[%s0 + $0x38] sm:$0xff]
  %v22 = vld [vmem:[%s0 + $0x40] sm:$0xff]
  %v23 = vld [vmem:[%s0 + $0x48] sm:$0xff]
  %v24 = vld [vmem:[%s0 + $0x50] sm:$0xff]
  %v25 = vld [vmem:[%s0 + $0x58] sm:$0xff]
  %v26 = vld [vmem:[%s1] sm:$0xff]
  %v27 = vld [vmem:[%s1 + $0x8] sm:$0xff]
  %v28 = vld [vmem:[%s1 + $0x10] sm:$0xff]
  %v29 = vld [vmem:[%s1 + $0x18] sm:$0xff]
  %v30 = vld [vmem:[%s1 + $0x20] sm:$0xff]
  %v31 = vld [vmem:[%s1 + $0x28] sm:$0xff]
  %v32 = vld [vmem:[%s1 + $0x30] sm:$0xff]
  %v33 = vld [vmem:[%s1 + $0x38] sm:$0xff]
  %v34 = vld [vmem:[%s1 + $0x40] sm:$0xff]
  %v35 = vld [vmem:[%s1 + $0x48] sm:$0xff]
  %v36 = vld [vmem:[%s1 + $0x50] sm:$0xff]
  %v37 = vld [vmem:[%s1 + $0x58] sm:$0xff]
  %v38 = vld [vmem:[%s1 + $0x60] sm:$0xff]
  %v39 = vld [vmem:[%s1 + $0x68] sm:$0xff]
  %v40 = vld [vmem:[%s1 + $0x70] sm:$0xff]
  %v41 = vld [vmem:[%s1 + $0x78] sm:$0xff]
  %v42 = vld [vmem:[%s1 + $0x80] sm:$0xff]
  %v43 = vld [vmem:[%s1 + $0x88] sm:$0xff]
  %v44 = vld [vmem:[%s1 + $0x90] sm:$0xff]
  %v45 = vld [vmem:[%s1 + $0x98] sm:$0xff]
  %v46 = vld [vmem:[%s1 + $0xa0] sm:$0xff]
  %v47 = vld [vmem:[%s1 + $0xa8] sm:$0xff]
  %v48 = vld [vmem:[%s1 + $0xb0] sm:$0xff]
  %v49 = vld [vmem:[%s1 + $0xb8] sm:$0xff]
  %v50 = vld [vmem:[%s1 + $0xc0] sm:$0xff]
  %v51 = vld [vmem:[%s1 + $0xc8] sm:$0xff]
  %v52 = vld [vmem:[%s1 + $0xd0] sm:$0xff]
  %v53 = vld [vmem:[%s1 + $0xd8] sm:$0xff]
  %v54 = vld [vmem:[%s1 + $0xe0] sm:$0xff]
  %v55 = vld [vmem:[%s1 + $0xe8] sm:$0xff]
  %v56 = vld [vmem:[%s1 + $0xf0] sm:$0xff]
  %v57 = vld [vmem:[%s1 + $0xf8] sm:$0xff]
  %v58 = vld [vmem:[%s1 + $0x100] sm:$0xff]
  %v59 = vld [vmem:[%s1 + $0x108] sm:$0xff]
  %v60 = vld [vmem:[%s1 + $0x110] sm:$0xff]
  %v61 = vld [vmem:[%s1 + $0x118] sm:$0xff]
  %v62 = vld [vmem:[%s1 + $0x120] sm:$0xff]
  %v63 = vld [vmem:[%s1 + $0x128] sm:$0xff]
  %v64 = vld [vmem:[%s1 + $0x130] sm:$0xff]
  %v65 = vld [vmem:[%s1 + $0x138] sm:$0xff]
  %v66 = vld [vmem:[%s1 + $0x140] sm:$0xff]
  %v67 = vld [vmem:[%s1 + $0x148] sm:$0xff]
  %v68 = vld [vmem:[%s1 + $0x150] sm:$0xff]
  %v69 = vld [vmem:[%s1 + $0x158] sm:$0xff]
  %v70 = vld [vmem:[%s1 + $0x160] sm:$0xff]
  %v71 = vld [vmem:[%s1 + $0x168] sm:$0xff]
  %v72 = vld [vmem:[%s1 + $0x170] sm:$0xff]
  %v73 = vld [vmem:[%s1 + $0x178] sm:$0xff]
  %v74 = vld [vmem:[%s1 + $0x180] sm:$0xff]
  %v75 = vld [vmem:[%s1 + $0x188] sm:$0xff]
  %v76 = vld [vmem:[%s1 + $0x190] sm:$0xff]
  %v77 = vld [vmem:[%s1 + $0x198] sm:$0xff]
  %v78 = vld [vmem:[%s1 + $0x1a0] sm:$0xff]
  %v79 = vld [vmem:[%s1 + $0x1a8] sm:$0xff]
  %v80 = vld [vmem:[%s1 + $0x1b0] sm:$0xff]
  %v81 = vld [vmem:[%s1 + $0x1b8] sm:$0xff]
  %v82 = vld [vmem:[%s1 + $0x1c0] sm:$0xff]
  %v83 = vld [vmem:[%s1 + $0x1c8] sm:$0xff]
  %v84 = vld [vmem:[%s1 + $0x1d0] sm:$0xff]
  %v85 = vld [vmem:[%s1 + $0x1d8] sm:$0xff]
  %v86 = vld [vmem:[%s1 + $0x1e0] sm:$0xff]
  %v87 = vld [vmem:[%s1 + $0x1e8] sm:$0xff]
  %v88 = vld [vmem:[%s1 + $0x1f0] sm:$0xff]
  %v89 = vld [vmem:[%s1 + $0x1f8] sm:$0xff]
  %v90 = vld [vmem:[%s2] sm:$0x1]
  %v92 = vperm.slane %v90, 0
  %94 = vmatpush.msra.mxu0 %v41
  %95 = vmatpush.msra.mxu0 %v40
  %96 = vmatpush.msra.mxu0 %v39
  %97 = vmatpush.msra.mxu0 %v38
  %98 = vmatpush.msra.mxu0 %v37
  %99 = vmatpush.msra.mxu0 %v36
  %100 = vmatpush.msra.mxu0 %v35
  %101 = vmatpush.msra.mxu0 %v34
  %102 = vmatpush.msra.mxu0 %v33
  %103 = vmatpush.msra.mxu0 %v32
  %104 = vmatpush.msra.mxu0 %v31
  %105 = vmatpush.msra.mxu0 %v30
  %106 = vmatpush.msra.mxu0 %v29
  %107 = vmatpush.msra.mxu0 %v28
  %108 = vmatpush.msra.mxu0 %v27
  %109 = vmatpush.msra.mxu0 %v26
  %110 = vmatmul.f32.gmra.mxu0 %v14
  %v111 = vpop.f32.mrf.mxu0
  %v112 = vadd.f32 %v92, %v111
  %113 = vmatmul.f32.gmra.mxu0 %v18
  %v114 = vpop.f32.mrf.mxu0
  %v115 = vadd.f32 %v92, %v114
  %116 = vmatmul.f32.gmra.mxu0 %v22
  %v117 = vpop.f32.mrf.mxu0
  %v118 = vadd.f32 %v92, %v117
  %119 = vdwg.mxu0
  %120 = vmatpush.msra.mxu0 %v57
  %121 = vmatpush.msra.mxu0 %v56
  %122 = vmatpush.msra.mxu0 %v55
  %123 = vmatpush.msra.mxu0 %v54
  %124 = vmatpush.msra.mxu0 %v53
  %125 = vmatpush.msra.mxu0 %v52
  %126 = vmatpush.msra.mxu0 %v51
  %127 = vmatpush.msra.mxu0 %v50
  %128 = vmatpush.msra.mxu0 %v49
  %129 = vmatpush.msra.mxu0 %v48
  %130 = vmatpush.msra.mxu0 %v47
  %131 = vmatpush.msra.mxu0 %v46
  %132 = vmatpush.msra.mxu0 %v45
  %133 = vmatpush.msra.mxu0 %v44
  %134 = vmatpush.msra.mxu0 %v43
  %135 = vmatpush.msra.mxu0 %v42
  %136 = vmatmul.f32.gmra.mxu0 %v15
  %v137 = vpop.f32.mrf.mxu0
  %v138 = vadd.f32 %v112, %v137
  %139 = vmatmul.f32.gmra.mxu0 %v19
  %v140 = vpop.f32.mrf.mxu0
  %v141 = vadd.f32 %v115, %v140
  %142 = vmatmul.f32.gmra.mxu0 %v23
  %v143 = vpop.f32.mrf.mxu0
  %v144 = vadd.f32 %v118, %v143
  %145 = vdwg.mxu0
  %146 = vmatpush.msra.mxu0 %v73
  %147 = vmatpush.msra.mxu0 %v72
  %148 = vmatpush.msra.mxu0 %v71
  %149 = vmatpush.msra.mxu0 %v70
  %150 = vmatpush.msra.mxu0 %v69
  %151 = vmatpush.msra.mxu0 %v68
  %152 = vmatpush.msra.mxu0 %v67
  %153 = vmatpush.msra.mxu0 %v66
  %154 = vmatpush.msra.mxu0 %v65
  %155 = vmatpush.msra.mxu0 %v64
  %156 = vmatpush.msra.mxu0 %v63
  %157 = vmatpush.msra.mxu0 %v62
  %158 = vmatpush.msra.mxu0 %v61
  %159 = vmatpush.msra.mxu0 %v60
  %160 = vmatpush.msra.mxu0 %v59
  %161 = vmatpush.msra.mxu0 %v58
  %162 = vmatmul.f32.gmra.mxu0 %v16
  %v163 = vpop.f32.mrf.mxu0
  %v164 = vadd.f32 %v138, %v163
  %165 = vmatmul.f32.gmra.mxu0 %v20
  %v166 = vpop.f32.mrf.mxu0
  %v167 = vadd.f32 %v141, %v166
  %168 = vmatmul.f32.gmra.mxu0 %v24
  %v169 = vpop.f32.mrf.mxu0
  %v170 = vadd.f32 %v144, %v169
  %171 = vdwg.mxu0
  %172 = vmatpush.msra.mxu0 %v89
  %173 = vmatpush.msra.mxu0 %v88
  %174 = vmatpush.msra.mxu0 %v87
  %175 = vmatpush.msra.mxu0 %v86
  %176 = vmatpush.msra.mxu0 %v85
  %177 = vmatpush.msra.mxu0 %v84
  %178 = vmatpush.msra.mxu0 %v83
  %179 = vmatpush.msra.mxu0 %v82
  %180 = vmatpush.msra.mxu0 %v81
  %181 = vmatpush.msra.mxu0 %v80
  %182 = vmatpush.msra.mxu0 %v79
  %183 = vmatpush.msra.mxu0 %v78
  %184 = vmatpush.msra.mxu0 %v77
  %185 = vmatpush.msra.mxu0 %v76
  %186 = vmatpush.msra.mxu0 %v75
  %187 = vmatpush.msra.mxu0 %v74
  %188 = vmatmul.f32.gmra.mxu0 %v17
  %v189 = vpop.f32.mrf.mxu0
  %v190 = vadd.f32 %v164, %v189
  %191 = vmatmul.f32.gmra.mxu0 %v21
  %v192 = vpop.f32.mrf.mxu0
  %v193 = vadd.f32 %v167, %v192
  %194 = vmatmul.f32.gmra.mxu0 %v25
  %v195 = vpop.f32.mrf.mxu0
  %v196 = vadd.f32 %v170, %v195
  %197 = vdwg.mxu0
  %v198 = vmax.f32 %v190, 0.0
  %v199 = vmax.f32 %v193, 0.0
  %v200 = vmax.f32 %v196, 0.0
  %201 = vst [vmem:[%s3] sm:$0xff] %v198
  %202 = vst [vmem:[%s3 + $0x8] sm:$0xff] %v199
  %203 = vst [vmem:[%s3 + $0x10] sm:$0xff] %v200
  // Predicated region
  $region14: #{meta_controller_forward.5} parent=0 // pred_check
    _
  $region15: #{meta_controller_forward.5} parent=0 // pred_check_branch
    %205 = sbr.rel (0) target = $region17
  $region16: #{meta_controller_forward.5} parent=0 // pred_region
    _
  $region17: #{meta_controller_forward.5} parent=0 // pred_fallthru
    _
  // Predicated region
  $region18: #{meta_controller_forward.5} parent=0 // pred_check
    _
  $region19: #{meta_controller_forward.5} parent=0 // pred_check_branch
    %207 = sbr.rel (0) target = $region21
  $region20: #{meta_controller_forward.5} parent=0 // pred_region
    _
  $region21: #{meta_controller_forward.5} parent=0 // pred_fallthru
    _

// kernel: meta_controller_forward.6
$region0: #{meta_controller_forward.6}
  #allocation0 [shape = 'u32[]', space=smem, size = 0x4, offset = 0x4, fixed_abs, tag = 'smem constant byte address 0x4 - core index']
  #allocation1 [shape = 'u32[72,128]{1,0:T(1,128)}', space=vmem, size = 0x9000, scoped, tag = 'internal scratch']
  %s0 = inlined_call_operand.vmem [shape: f32[8,640], index: 0, kind: input, shape index: {}]
  %s1 = inlined_call_operand.vmem [shape: f32[640,128], index: 1, kind: input, shape index: {}]
  %s2 = inlined_call_operand.vmem [shape: f32[1,128], index: 2, kind: input, shape index: {}]
  %s3 = inlined_call_operand.vmem [shape: f32[8,128], index: 3, kind: output, shape index: {}]
  %s4 = sld [smem:[#allocation0]]
  $region22: #{meta_controller_forward.6} parent=0
    _
  %s6 = ssub.s32 1, %s4
  %s7 = scalar_select 0, %s6, %s4
  // Predicated region
  $region2: #{meta_controller_forward.6} parent=0 // pred_check
    _
  $region3: #{meta_controller_forward.6} parent=0 // pred_check_branch
    %9 = sbr.rel (0) target = $region5
  $region4: #{meta_controller_forward.6} parent=0 // pred_region
    _
  $region5: #{meta_controller_forward.6} parent=0 // pred_fallthru
    _
  // Predicated region
  $region6: #{meta_controller_forward.6} parent=0 // pred_check
    _
  $region7: #{meta_controller_forward.6} parent=0 // pred_check_branch
    %11 = sbr.rel (0) target = $region9
  $region8: #{meta_controller_forward.6} parent=0 // pred_region
    _
  $region9: #{meta_controller_forward.6} parent=0 // pred_fallthru
    _
  // Predicated region
  $region10: #{meta_controller_forward.6} parent=0 // pred_check
    _
  $region11: #{meta_controller_forward.6} parent=0 // pred_check_branch
    %13 = sbr.rel (0) target = $region13
  $region12: #{meta_controller_forward.6} parent=0 // pred_region
    _
  $region13: #{meta_controller_forward.6} parent=0 // pred_fallthru
    _
  %v14 = vld [vmem:[%s0] sm:$0xff]
  %v15 = vld [vmem:[%s0 + $0x8] sm:$0xff]
  %v16 = vld [vmem:[%s0 + $0x10] sm:$0xff]
  %v17 = vld [vmem:[%s0 + $0x18] sm:$0xff]
  %v18 = vld [vmem:[%s0 + $0x20] sm:$0xff]
  %v19 = vld [vmem:[%s1] sm:$0xff]
  %v20 = vld [vmem:[%s1 + $0x8] sm:$0xff]
  %v21 = vld [vmem:[%s1 + $0x10] sm:$0xff]
  %v22 = vld [vmem:[%s1 + $0x18] sm:$0xff]
  %v23 = vld [vmem:[%s1 + $0x20] sm:$0xff]
  %v24 = vld [vmem:[%s1 + $0x28] sm:$0xff]
  %v25 = vld [vmem:[%s1 + $0x30] sm:$0xff]
  %v26 = vld [vmem:[%s1 + $0x38] sm:$0xff]
  %v27 = vld [vmem:[%s1 + $0x40] sm:$0xff]
  %v28 = vld [vmem:[%s1 + $0x48] sm:$0xff]
  %v29 = vld [vmem:[%s1 + $0x50] sm:$0xff]
  %v30 = vld [vmem:[%s1 + $0x58] sm:$0xff]
  %v31 = vld [vmem:[%s1 + $0x60] sm:$0xff]
  %v32 = vld [vmem:[%s1 + $0x68] sm:$0xff]
  %v33 = vld [vmem:[%s1 + $0x70] sm:$0xff]
  %v34 = vld [vmem:[%s1 + $0x78] sm:$0xff]
  %v35 = vld [vmem:[%s1 + $0x80] sm:$0xff]
  %v36 = vld [vmem:[%s1 + $0x88] sm:$0xff]
  %v37 = vld [vmem:[%s1 + $0x90] sm:$0xff]
  %v38 = vld [vmem:[%s1 + $0x98] sm:$0xff]
  %v39 = vld [vmem:[%s1 + $0xa0] sm:$0xff]
  %v40 = vld [vmem:[%s1 + $0xa8] sm:$0xff]
  %v41 = vld [vmem:[%s1 + $0xb0] sm:$0xff]
  %v42 = vld [vmem:[%s1 + $0xb8] sm:$0xff]
  %v43 = vld [vmem:[%s1 + $0xc0] sm:$0xff]
  %v44 = vld [vmem:[%s1 + $0xc8] sm:$0xff]
  %v45 = vld [vmem:[%s1 + $0xd0] sm:$0xff]
  %v46 = vld [vmem:[%s1 + $0xd8] sm:$0xff]
  %v47 = vld [vmem:[%s1 + $0xe0] sm:$0xff]
  %v48 = vld [vmem:[%s1 + $0xe8] sm:$0xff]
  %v49 = vld [vmem:[%s1 + $0xf0] sm:$0xff]
  %v50 = vld [vmem:[%s1 + $0xf8] sm:$0xff]
  %v51 = vld [vmem:[%s1 + $0x100] sm:$0xff]
  %v52 = vld [vmem:[%s1 + $0x108] sm:$0xff]
  %v53 = vld [vmem:[%s1 + $0x110] sm:$0xff]
  %v54 = vld [vmem:[%s1 + $0x118] sm:$0xff]
  %v55 = vld [vmem:[%s1 + $0x120] sm:$0xff]
  %v56 = vld [vmem:[%s1 + $0x128] sm:$0xff]
  %v57 = vld [vmem:[%s1 + $0x130] sm:$0xff]
  %v58 = vld [vmem:[%s1 + $0x138] sm:$0xff]
  %v59 = vld [vmem:[%s1 + $0x140] sm:$0xff]
  %v60 = vld [vmem:[%s1 + $0x148] sm:$0xff]
  %v61 = vld [vmem:[%s1 + $0x150] sm:$0xff]
  %v62 = vld [vmem:[%s1 + $0x158] sm:$0xff]
  %v63 = vld [vmem:[%s1 + $0x160] sm:$0xff]
  %v64 = vld [vmem:[%s1 + $0x168] sm:$0xff]
  %v65 = vld [vmem:[%s1 + $0x170] sm:$0xff]
  %v66 = vld [vmem:[%s1 + $0x178] sm:$0xff]
  %v67 = vld [vmem:[%s1 + $0x180] sm:$0xff]
  %v68 = vld [vmem:[%s1 + $0x188] sm:$0xff]
  %v69 = vld [vmem:[%s1 + $0x190] sm:$0xff]
  %v70 = vld [vmem:[%s1 + $0x198] sm:$0xff]
  %v71 = vld [vmem:[%s1 + $0x1a0] sm:$0xff]
  %v72 = vld [vmem:[%s1 + $0x1a8] sm:$0xff]
  %v73 = vld [vmem:[%s1 + $0x1b0] sm:$0xff]
  %v74 = vld [vmem:[%s1 + $0x1b8] sm:$0xff]
  %v75 = vld [vmem:[%s1 + $0x1c0] sm:$0xff]
  %v76 = vld [vmem:[%s1 + $0x1c8] sm:$0xff]
  %v77 = vld [vmem:[%s1 + $0x1d0] sm:$0xff]
  %v78 = vld [vmem:[%s1 + $0x1d8] sm:$0xff]
  %v79 = vld [vmem:[%s1 + $0x1e0] sm:$0xff]
  %v80 = vld [vmem:[%s1 + $0x1e8] sm:$0xff]
  %v81 = vld [vmem:[%s1 + $0x1f0] sm:$0xff]
  %v82 = vld [vmem:[%s1 + $0x1f8] sm:$0xff]
  %v83 = vld [vmem:[%s1 + $0x200] sm:$0xff]
  %v84 = vld [vmem:[%s1 + $0x208] sm:$0xff]
  %v85 = vld [vmem:[%s1 + $0x210] sm:$0xff]
  %v86 = vld [vmem:[%s1 + $0x218] sm:$0xff]
  %v87 = vld [vmem:[%s1 + $0x220] sm:$0xff]
  %v88 = vld [vmem:[%s1 + $0x228] sm:$0xff]
  %v89 = vld [vmem:[%s1 + $0x230] sm:$0xff]
  %v90 = vld [vmem:[%s1 + $0x238] sm:$0xff]
  %v91 = vld [vmem:[%s1 + $0x240] sm:$0xff]
  %v92 = vld [vmem:[%s1 + $0x248] sm:$0xff]
  %v93 = vld [vmem:[%s1 + $0x250] sm:$0xff]
  %v94 = vld [vmem:[%s1 + $0x258] sm:$0xff]
  %v95 = vld [vmem:[%s1 + $0x260] sm:$0xff]
  %v96 = vld [vmem:[%s1 + $0x268] sm:$0xff]
  %v97 = vld [vmem:[%s1 + $0x270] sm:$0xff]
  %v98 = vld [vmem:[%s1 + $0x278] sm:$0xff]
  %v99 = vld [vmem:[%s2] sm:$0x1]
  %v101 = vperm.slane %v99, 0
  %103 = vmatpush.msra.mxu0 %v34
  %104 = vmatpush.msra.mxu0 %v33
  %105 = vmatpush.msra.mxu0 %v32
  %106 = vmatpush.msra.mxu0 %v31
  %107 = vmatpush.msra.mxu0 %v30
  %108 = vmatpush.msra.mxu0 %v29
  %109 = vmatpush.msra.mxu0 %v28
  %110 = vmatpush.msra.mxu0 %v27
  %111 = vmatpush.msra.mxu0 %v26
  %112 = vmatpush.msra.mxu0 %v25
  %113 = vmatpush.msra.mxu0 %v24
  %114 = vmatpush.msra.mxu0 %v23
  %115 = vmatpush.msra.mxu0 %v22
  %116 = vmatpush.msra.mxu0 %v21
  %117 = vmatpush.msra.mxu0 %v20
  %118 = vmatpush.msra.mxu0 %v19
  %119 = vmatmul.f32.gmra.mxu0 %v14
  %v120 = vpop.f32.mrf.mxu0
  %v121 = vadd.f32 %v101, %v120
  %122 = vdwg.mxu0
  %123 = vmatpush.msra.mxu0 %v50
  %124 = vmatpush.msra.mxu0 %v49
  %125 = vmatpush.msra.mxu0 %v48
  %126 = vmatpush.msra.mxu0 %v47
  %127 = vmatpush.msra.mxu0 %v46
  %128 = vmatpush.msra.mxu0 %v45
  %129 = vmatpush.msra.mxu0 %v44
  %130 = vmatpush.msra.mxu0 %v43
  %131 = vmatpush.msra.mxu0 %v42
  %132 = vmatpush.msra.mxu0 %v41
  %133 = vmatpush.msra.mxu0 %v40
  %134 = vmatpush.msra.mxu0 %v39
  %135 = vmatpush.msra.mxu0 %v38
  %136 = vmatpush.msra.mxu0 %v37
  %137 = vmatpush.msra.mxu0 %v36
  %138 = vmatpush.msra.mxu0 %v35
  %139 = vmatmul.f32.gmra.mxu0 %v15
  %v140 = vpop.f32.mrf.mxu0
  %v141 = vadd.f32 %v121, %v140
  %142 = vdwg.mxu0
  %143 = vmatpush.msra.mxu0 %v66
  %144 = vmatpush.msra.mxu0 %v65
  %145 = vmatpush.msra.mxu0 %v64
  %146 = vmatpush.msra.mxu0 %v63
  %147 = vmatpush.msra.mxu0 %v62
  %148 = vmatpush.msra.mxu0 %v61
  %149 = vmatpush.msra.mxu0 %v60
  %150 = vmatpush.msra.mxu0 %v59
  %151 = vmatpush.msra.mxu0 %v58
  %152 = vmatpush.msra.mxu0 %v57
  %153 = vmatpush.msra.mxu0 %v56
  %154 = vmatpush.msra.mxu0 %v55
  %155 = vmatpush.msra.mxu0 %v54
  %156 = vmatpush.msra.mxu0 %v53
  %157 = vmatpush.msra.mxu0 %v52
  %158 = vmatpush.msra.mxu0 %v51
  %159 = vmatmul.f32.gmra.mxu0 %v16
  %v160 = vpop.f32.mrf.mxu0
  %v161 = vadd.f32 %v141, %v160
  %162 = vdwg.mxu0
  %163 = vmatpush.msra.mxu0 %v82
  %164 = vmatpush.msra.mxu0 %v81
  %165 = vmatpush.msra.mxu0 %v80
  %166 = vmatpush.msra.mxu0 %v79
  %167 = vmatpush.msra.mxu0 %v78
  %168 = vmatpush.msra.mxu0 %v77
  %169 = vmatpush.msra.mxu0 %v76
  %170 = vmatpush.msra.mxu0 %v75
  %171 = vmatpush.msra.mxu0 %v74
  %172 = vmatpush.msra.mxu0 %v73
  %173 = vmatpush.msra.mxu0 %v72
  %174 = vmatpush.msra.mxu0 %v71
  %175 = vmatpush.msra.mxu0 %v70
  %176 = vmatpush.msra.mxu0 %v69
  %177 = vmatpush.msra.mxu0 %v68
  %178 = vmatpush.msra.mxu0 %v67
  %179 = vmatmul.f32.gmra.mxu0 %v17
  %v180 = vpop.f32.mrf.mxu0
  %v181 = vadd.f32 %v161, %v180
  %182 = vdwg.mxu0
  %183 = vmatpush.msra.mxu0 %v98
  %184 = vmatpush.msra.mxu0 %v97
  %185 = vmatpush.msra.mxu0 %v96
  %186 = vmatpush.msra.mxu0 %v95
  %187 = vmatpush.msra.mxu0 %v94
  %188 = vmatpush.msra.mxu0 %v93
  %189 = vmatpush.msra.mxu0 %v92
  %190 = vmatpush.msra.mxu0 %v91
  %191 = vmatpush.msra.mxu0 %v90
  %192 = vmatpush.msra.mxu0 %v89
  %193 = vmatpush.msra.mxu0 %v88
  %194 = vmatpush.msra.mxu0 %v87
  %195 = vmatpush.msra.mxu0 %v86
  %196 = vmatpush.msra.mxu0 %v85
  %197 = vmatpush.msra.mxu0 %v84
  %198 = vmatpush.msra.mxu0 %v83
  %199 = vmatmul.f32.gmra.mxu0 %v18
  %v200 = vpop.f32.mrf.mxu0
  %v201 = vadd.f32 %v181, %v200
  %202 = vdwg.mxu0
  %v203 = vmax.f32 %v201, 0.0
  %204 = vst [vmem:[%s3] sm:$0xff] %v203
  // Predicated region
  $region14: #{meta_controller_forward.6} parent=0 // pred_check
    _
  $region15: #{meta_controller_forward.6} parent=0 // pred_check_branch
    %206 = sbr.rel (0) target = $region17
  $region16: #{meta_controller_forward.6} parent=0 // pred_region
    _
  $region17: #{meta_controller_forward.6} parent=0 // pred_fallthru
    _
  // Predicated region
  $region18: #{meta_controller_forward.6} parent=0 // pred_check
    _
  $region19: #{meta_controller_forward.6} parent=0 // pred_check_branch
    %208 = sbr.rel (0) target = $region21
  $region20: #{meta_controller_forward.6} parent=0 // pred_region
    _
  $region21: #{meta_controller_forward.6} parent=0 // pred_fallthru
    _

// kernel: meta_controller_forward.7
$region0: #{meta_controller_forward.7}
  #allocation0 [shape = 'u32[]', space=smem, size = 0x4, offset = 0x4, fixed_abs, tag = 'smem constant byte address 0x4 - core index']
  #allocation1 [shape = 'u32[72,128]{1,0:T(1,128)}', space=vmem, size = 0x9000, scoped, tag = 'internal scratch']
  %s0 = inlined_call_operand.vmem [shape: f32[8,128], index: 0, kind: input, shape index: {}]
  %s1 = inlined_call_operand.vmem [shape: f32[128,512], index: 1, kind: input, shape index: {}]
  %s2 = inlined_call_operand.vmem [shape: f32[1,512], index: 2, kind: input, shape index: {}]
  %s3 = inlined_call_operand.vmem [shape: f32[512,128], index: 3, kind: input, shape index: {}]
  %s4 = inlined_call_operand.vmem [shape: f32[1,128], index: 4, kind: input, shape index: {}]
  %s5 = inlined_call_operand.vmem [shape: f32[128,512], index: 5, kind: input, shape index: {}]
  %s6 = inlined_call_operand.vmem [shape: f32[1,512], index: 6, kind: input, shape index: {}]
  %s7 = inlined_call_operand.vmem [shape: f32[512,128], index: 7, kind: input, shape index: {}]
  %s8 = inlined_call_operand.vmem [shape: f32[1,128], index: 8, kind: input, shape index: {}]
  %s9 = inlined_call_operand.vmem [shape: f32[8,128], index: 9, kind: output, shape index: {}]
  %s10 = sld [smem:[#allocation0]]
  $region46: #{meta_controller_forward.7} parent=0
    _
  %s12 = ssub.s32 1, %s10
  %s13 = scalar_select 0, %s12, %s10
  // Predicated region
  $region2: #{meta_controller_forward.7} parent=0 // pred_check
    _
  $region3: #{meta_controller_forward.7} parent=0 // pred_check_branch
    %15 = sbr.rel (0) target = $region5
  $region4: #{meta_controller_forward.7} parent=0 // pred_region
    _
  $region5: #{meta_controller_forward.7} parent=0 // pred_fallthru
    _
  // Predicated region
  $region6: #{meta_controller_forward.7} parent=0 // pred_check
    _
  $region7: #{meta_controller_forward.7} parent=0 // pred_check_branch
    %17 = sbr.rel (0) target = $region9
  $region8: #{meta_controller_forward.7} parent=0 // pred_region
    _
  $region9: #{meta_controller_forward.7} parent=0 // pred_fallthru
    _
  // Predicated region
  $region10: #{meta_controller_forward.7} parent=0 // pred_check
    _
  $region11: #{meta_controller_forward.7} parent=0 // pred_check_branch
    %19 = sbr.rel (0) target = $region13
  $region12: #{meta_controller_forward.7} parent=0 // pred_region
    _
  $region13: #{meta_controller_forward.7} parent=0 // pred_fallthru
    _
  // Predicated region
  $region14: #{meta_controller_forward.7} parent=0 // pred_check
    _
  $region15: #{meta_controller_forward.7} parent=0 // pred_check_branch
    %21 = sbr.rel (0) target = $region17
  $region16: #{meta_controller_forward.7} parent=0 // pred_region
    _
  $region17: #{meta_controller_forward.7} parent=0 // pred_fallthru
    _
  // Predicated region
  $region18: #{meta_controller_forward.7} parent=0 // pred_check
    _
  $region19: #{meta_controller_forward.7} parent=0 // pred_check_branch
    %23 = sbr.rel (0) target = $region21
  $region20: #{meta_controller_forward.7} parent=0 // pred_region
    _
  $region21: #{meta_controller_forward.7} parent=0 // pred_fallthru
    _
  // Predicated region
  $region22: #{meta_controller_forward.7} parent=0 // pred_check
    _
  $region23: #{meta_controller_forward.7} parent=0 // pred_check_branch
    %25 = sbr.rel (0) target = $region25
  $region24: #{meta_controller_forward.7} parent=0 // pred_region
    _
  $region25: #{meta_controller_forward.7} parent=0 // pred_fallthru
    _
  // Predicated region
  $region26: #{meta_controller_forward.7} parent=0 // pred_check
    _
  $region27: #{meta_controller_forward.7} parent=0 // pred_check_branch
    %27 = sbr.rel (0) target = $region29
  $region28: #{meta_controller_forward.7} parent=0 // pred_region
    _
  $region29: #{meta_controller_forward.7} parent=0 // pred_fallthru
    _
  // Predicated region
  $region30: #{meta_controller_forward.7} parent=0 // pred_check
    _
  $region31: #{meta_controller_forward.7} parent=0 // pred_check_branch
    %29 = sbr.rel (0) target = $region33
  $region32: #{meta_controller_forward.7} parent=0 // pred_region
    _
  $region33: #{meta_controller_forward.7} parent=0 // pred_fallthru
    _
  // Predicated region
  $region34: #{meta_controller_forward.7} parent=0 // pred_check
    _
  $region35: #{meta_controller_forward.7} parent=0 // pred_check_branch
    %31 = sbr.rel (0) target = $region37
  $region36: #{meta_controller_forward.7} parent=0 // pred_region
    _
  $region37: #{meta_controller_forward.7} parent=0 // pred_fallthru
    _
  %v32 = vld [vmem:[%s0] sm:$0xff]
  %v33 = vld [vmem:[%s1] sm:$0xff]
  %v34 = vld [vmem:[%s1 + $0x8] sm:$0xff]
  %v35 = vld [vmem:[%s1 + $0x10] sm:$0xff]
  %v36 = vld [vmem:[%s1 + $0x18] sm:$0xff]
  %v37 = vld [vmem:[%s1 + $0x20] sm:$0xff]
  %v38 = vld [vmem:[%s1 + $0x28] sm:$0xff]
  %v39 = vld [vmem:[%s1 + $0x30] sm:$0xff]
  %v40 = vld [vmem:[%s1 + $0x38] sm:$0xff]
  %v41 = vld [vmem:[%s1 + $0x40] sm:$0xff]
  %v42 = vld [vmem:[%s1 + $0x48] sm:$0xff]
  %v43 = vld [vmem:[%s1 + $0x50] sm:$0xff]
  %v44 = vld [vmem:[%s1 + $0x58] sm:$0xff]
  %v45 = vld [vmem:[%s1 + $0x60] sm:$0xff]
  %v46 = vld [vmem:[%s1 + $0x68] sm:$0xff]
  %v47 = vld [vmem:[%s1 + $0x70] sm:$0xff]
  %v48 = vld [vmem:[%s1 + $0x78] sm:$0xff]
  %v49 = vld [vmem:[%s1 + $0x80] sm:$0xff]
  %v50 = vld [vmem:[%s1 + $0x88] sm:$0xff]
  %v51 = vld [vmem:[%s1 + $0x90] sm:$0xff]
  %v52 = vld [vmem:[%s1 + $0x98] sm:$0xff]
  %v53 = vld [vmem:[%s1 + $0xa0] sm:$0xff]
  %v54 = vld [vmem:[%s1 + $0xa8] sm:$0xff]
  %v55 = vld [vmem:[%s1 + $0xb0] sm:$0xff]
  %v56 = vld [vmem:[%s1 + $0xb8] sm:$0xff]
  %v57 = vld [vmem:[%s1 + $0xc0] sm:$0xff]
  %v58 = vld [vmem:[%s1 + $0xc8] sm:$0xff]
  %v59 = vld [vmem:[%s1 + $0xd0] sm:$0xff]
  %v60 = vld [vmem:[%s1 + $0xd8] sm:$0xff]
  %v61 = vld [vmem:[%s1 + $0xe0] sm:$0xff]
  %v62 = vld [vmem:[%s1 + $0xe8] sm:$0xff]
  %v63 = vld [vmem:[%s1 + $0xf0] sm:$0xff]
  %v64 = vld [vmem:[%s1 + $0xf8] sm:$0xff]
  %v65 = vld [vmem:[%s1 + $0x100] sm:$0xff]
  %v66 = vld [vmem:[%s1 + $0x108] sm:$0xff]
  %v67 = vld [vmem:[%s1 + $0x110] sm:$0xff]
  %v68 = vld [vmem:[%s1 + $0x118] sm:$0xff]
  %v69 = vld [vmem:[%s1 + $0x120] sm:$0xff]
  %v70 = vld [vmem:[%s1 + $0x128] sm:$0xff]
  %v71 = vld [vmem:[%s1 + $0x130] sm:$0xff]
  %v72 = vld [vmem:[%s1 + $0x138] sm:$0xff]
  %v73 = vld [vmem:[%s1 + $0x140] sm:$0xff]
  %v74 = vld [vmem:[%s1 + $0x148] sm:$0xff]
  %v75 = vld [vmem:[%s1 + $0x150] sm:$0xff]
  %v76 = vld [vmem:[%s1 + $0x158] sm:$0xff]
  %v77 = vld [vmem:[%s1 + $0x160] sm:$0xff]
  %v78 = vld [vmem:[%s1 + $0x168] sm:$0xff]
  %v79 = vld [vmem:[%s1 + $0x170] sm:$0xff]
  %v80 = vld [vmem:[%s1 + $0x178] sm:$0xff]
  %v81 = vld [vmem:[%s1 + $0x180] sm:$0xff]
  %v82 = vld [vmem:[%s1 + $0x188] sm:$0xff]
  %v83 = vld [vmem:[%s1 + $0x190] sm:$0xff]
  %v84 = vld [vmem:[%s1 + $0x198] sm:$0xff]
  %v85 = vld [vmem:[%s1 + $0x1a0] sm:$0xff]
  %v86 = vld [vmem:[%s1 + $0x1a8] sm:$0xff]
  %v87 = vld [vmem:[%s1 + $0x1b0] sm:$0xff]
  %v88 = vld [vmem:[%s1 + $0x1b8] sm:$0xff]
  %v89 = vld [vmem:[%s1 + $0x1c0] sm:$0xff]
  %v90 = vld [vmem:[%s1 + $0x1c8] sm:$0xff]
  %v91 = vld [vmem:[%s1 + $0x1d0] sm:$0xff]
  %v92 = vld [vmem:[%s1 + $0x1d8] sm:$0xff]
  %v93 = vld [vmem:[%s1 + $0x1e0] sm:$0xff]
  %v94 = vld [vmem:[%s1 + $0x1e8] sm:$0xff]
  %v95 = vld [vmem:[%s1 + $0x1f0] sm:$0xff]
  %v96 = vld [vmem:[%s1 + $0x1f8] sm:$0xff]
  %v97 = vld [vmem:[%s2] sm:$0xf]
  %v99 = vperm.slane %v97, 0
  %v100 = vperm.slane %v97, 1
  %v101 = vperm.slane %v97, 2
  %v102 = vperm.slane %v97, 3
  %107 = vmatpush.msra.mxu0 %v93
  %108 = vmatpush.msra.mxu0 %v89
  %109 = vmatpush.msra.mxu0 %v85
  %110 = vmatpush.msra.mxu0 %v81
  %111 = vmatpush.msra.mxu0 %v77
  %112 = vmatpush.msra.mxu0 %v73
  %113 = vmatpush.msra.mxu0 %v69
  %114 = vmatpush.msra.mxu0 %v65
  %115 = vmatpush.msra.mxu0 %v61
  %116 = vmatpush.msra.mxu0 %v57
  %117 = vmatpush.msra.mxu0 %v53
  %118 = vmatpush.msra.mxu0 %v49
  %119 = vmatpush.msra.mxu0 %v45
  %120 = vmatpush.msra.mxu0 %v41
  %121 = vmatpush.msra.mxu0 %v37
  %122 = vmatpush.msra.mxu0 %v33
  %123 = vmatmul.f32.gmra.mxu0 %v32
  %v124 = vpop.f32.mrf.mxu0
  %v125 = vadd.f32 %v99, %v124
  %126 = vdwg.mxu0
  %127 = vmatpush.msra.mxu0 %v94
  %128 = vmatpush.msra.mxu0 %v90
  %129 = vmatpush.msra.mxu0 %v86
  %130 = vmatpush.msra.mxu0 %v82
  %131 = vmatpush.msra.mxu0 %v78
  %132 = vmatpush.msra.mxu0 %v74
  %133 = vmatpush.msra.mxu0 %v70
  %134 = vmatpush.msra.mxu0 %v66
  %135 = vmatpush.msra.mxu0 %v62
  %136 = vmatpush.msra.mxu0 %v58
  %137 = vmatpush.msra.mxu0 %v54
  %138 = vmatpush.msra.mxu0 %v50
  %139 = vmatpush.msra.mxu0 %v46
  %140 = vmatpush.msra.mxu0 %v42
  %141 = vmatpush.msra.mxu0 %v38
  %142 = vmatpush.msra.mxu0 %v34
  %143 = vmatmul.f32.gmra.mxu0 %v32
  %v144 = vpop.f32.mrf.mxu0
  %v145 = vadd.f32 %v100, %v144
  %146 = vdwg.mxu0
  %147 = vmatpush.msra.mxu0 %v95
  %148 = vmatpush.msra.mxu0 %v91
  %149 = vmatpush.msra.mxu0 %v87
  %150 = vmatpush.msra.mxu0 %v83
  %151 = vmatpush.msra.mxu0 %v79
  %152 = vmatpush.msra.mxu0 %v75
  %153 = vmatpush.msra.mxu0 %v71
  %154 = vmatpush.msra.mxu0 %v67
  %155 = vmatpush.msra.mxu0 %v63
  %156 = vmatpush.msra.mxu0 %v59
  %157 = vmatpush.msra.mxu0 %v55
  %158 = vmatpush.msra.mxu0 %v51
  %159 = vmatpush.msra.mxu0 %v47
  %160 = vmatpush.msra.mxu0 %v43
  %161 = vmatpush.msra.mxu0 %v39
  %162 = vmatpush.msra.mxu0 %v35
  %163 = vmatmul.f32.gmra.mxu0 %v32
  %v164 = vpop.f32.mrf.mxu0
  %v165 = vadd.f32 %v101, %v164
  %166 = vdwg.mxu0
  %167 = vmatpush.msra.mxu0 %v96
  %168 = vmatpush.msra.mxu0 %v92
  %169 = vmatpush.msra.mxu0 %v88
  %170 = vmatpush.msra.mxu0 %v84
  %171 = vmatpush.msra.mxu0 %v80
  %172 = vmatpush.msra.mxu0 %v76
  %173 = vmatpush.msra.mxu0 %v72
  %174 = vmatpush.msra.mxu0 %v68
  %175 = vmatpush.msra.mxu0 %v64
  %176 = vmatpush.msra.mxu0 %v60
  %177 = vmatpush.msra.mxu0 %v56
  %178 = vmatpush.msra.mxu0 %v52
  %179 = vmatpush.msra.mxu0 %v48
  %180 = vmatpush.msra.mxu0 %v44
  %181 = vmatpush.msra.mxu0 %v40
  %182 = vmatpush.msra.mxu0 %v36
  %183 = vmatmul.f32.gmra.mxu0 %v32
  %v184 = vpop.f32.mrf.mxu0
  %v185 = vadd.f32 %v102, %v184
  %186 = vdwg.mxu0
  %v187 = vmax.f32 %v125, 0.0
  %v188 = vmax.f32 %v145, 0.0
  %v189 = vmax.f32 %v165, 0.0
  %v190 = vmax.f32 %v185, 0.0
  %v191 = vld [vmem:[%s3] sm:$0xff]
  %v192 = vld [vmem:[%s3 + $0x8] sm:$0xff]
  %v193 = vld [vmem:[%s3 + $0x10] sm:$0xff]
  %v194 = vld [vmem:[%s3 + $0x18] sm:$0xff]
  %v195 = vld [vmem:[%s3 + $0x20] sm:$0xff]
  %v196 = vld [vmem:[%s3 + $0x28] sm:$0xff]
  %v197 = vld [vmem:[%s3 + $0x30] sm:$0xff]
  %v198 = vld [vmem:[%s3 + $0x38] sm:$0xff]
  %v199 = vld [vmem:[%s3 + $0x40] sm:$0xff]
  %v200 = vld [vmem:[%s3 + $0x48] sm:$0xff]
  %v201 = vld [vmem:[%s3 + $0x50] sm:$0xff]
  %v202 = vld [vmem:[%s3 + $0x58] sm:$0xff]
  %v203 = vld [vmem:[%s3 + $0x60] sm:$0xff]
  %v204 = vld [vmem:[%s3 + $0x68] sm:$0xff]
  %v205 = vld [vmem:[%s3 + $0x70] sm:$0xff]
  %v206 = vld [vmem:[%s3 + $0x78] sm:$0xff]
  %v207 = vld [vmem:[%s3 + $0x80] sm:$0xff]
  %v208 = vld [vmem:[%s3 + $0x88] sm:$0xff]
  %v209 = vld [vmem:[%s3 + $0x90] sm:$0xff]
  %v210 = vld [vmem:[%s3 + $0x98] sm:$0xff]
  %v211 = vld [vmem:[%s3 + $0xa0] sm:$0xff]
  %v212 = vld [vmem:[%s3 + $0xa8] sm:$0xff]
  %v213 = vld [vmem:[%s3 + $0xb0] sm:$0xff]
  %v214 = vld [vmem:[%s3 + $0xb8] sm:$0xff]
  %v215 = vld [vmem:[%s3 + $0xc0] sm:$0xff]
  %v216 = vld [vmem:[%s3 + $0xc8] sm:$0xff]
  %v217 = vld [vmem:[%s3 + $0xd0] sm:$0xff]
  %v218 = vld [vmem:[%s3 + $0xd8] sm:$0xff]
  %v219 = vld [vmem:[%s3 + $0xe0] sm:$0xff]
  %v220 = vld [vmem:[%s3 + $0xe8] sm:$0xff]
  %v221 = vld [vmem:[%s3 + $0xf0] sm:$0xff]
  %v222 = vld [vmem:[%s3 + $0xf8] sm:$0xff]
  %v223 = vld [vmem:[%s3 + $0x100] sm:$0xff]
  %v224 = vld [vmem:[%s3 + $0x108] sm:$0xff]
  %v225 = vld [vmem:[%s3 + $0x110] sm:$0xff]
  %v226 = vld [vmem:[%s3 + $0x118] sm:$0xff]
  %v227 = vld [vmem:[%s3 + $0x120] sm:$0xff]
  %v228 = vld [vmem:[%s3 + $0x128] sm:$0xff]
  %v229 = vld [vmem:[%s3 + $0x130] sm:$0xff]
  %v230 = vld [vmem:[%s3 + $0x138] sm:$0xff]
  %v231 = vld [vmem:[%s3 + $0x140] sm:$0xff]
  %v232 = vld [vmem:[%s3 + $0x148] sm:$0xff]
  %v233 = vld [vmem:[%s3 + $0x150] sm:$0xff]
  %v234 = vld [vmem:[%s3 + $0x158] sm:$0xff]
  %v235 = vld [vmem:[%s3 + $0x160] sm:$0xff]
  %v236 = vld [vmem:[%s3 + $0x168] sm:$0xff]
  %v237 = vld [vmem:[%s3 + $0x170] sm:$0xff]
  %v238 = vld [vmem:[%s3 + $0x178] sm:$0xff]
  %v239 = vld [vmem:[%s3 + $0x180] sm:$0xff]
  %v240 = vld [vmem:[%s3 + $0x188] sm:$0xff]
  %v241 = vld [vmem:[%s3 + $0x190] sm:$0xff]
  %v242 = vld [vmem:[%s3 + $0x198] sm:$0xff]
  %v243 = vld [vmem:[%s3 + $0x1a0] sm:$0xff]
  %v244 = vld [vmem:[%s3 + $0x1a8] sm:$0xff]
  %v245 = vld [vmem:[%s3 + $0x1b0] sm:$0xff]
  %v246 = vld [vmem:[%s3 + $0x1b8] sm:$0xff]
  %v247 = vld [vmem:[%s3 + $0x1c0] sm:$0xff]
  %v248 = vld [vmem:[%s3 + $0x1c8] sm:$0xff]
  %v249 = vld [vmem:[%s3 + $0x1d0] sm:$0xff]
  %v250 = vld [vmem:[%s3 + $0x1d8] sm:$0xff]
  %v251 = vld [vmem:[%s3 + $0x1e0] sm:$0xff]
  %v252 = vld [vmem:[%s3 + $0x1e8] sm:$0xff]
  %v253 = vld [vmem:[%s3 + $0x1f0] sm:$0xff]
  %v254 = vld [vmem:[%s3 + $0x1f8] sm:$0xff]
  %v255 = vld [vmem:[%s4] sm:$0x1]
  %v257 = vperm.slane %v255, 0
  %259 = vmatpush.msra.mxu0 %v206
  %260 = vmatpush.msra.mxu0 %v205
  %261 = vmatpush.msra.mxu0 %v204
  %262 = vmatpush.msra.mxu0 %v203
  %263 = vmatpush.msra.mxu0 %v202
  %264 = vmatpush.msra.mxu0 %v201
  %265 = vmatpush.msra.mxu0 %v200
  %266 = vmatpush.msra.mxu0 %v199
  %267 = vmatpush.msra.mxu0 %v198
  %268 = vmatpush.msra.mxu0 %v197
  %269 = vmatpush.msra.mxu0 %v196
  %270 = vmatpush.msra.mxu0 %v195
  %271 = vmatpush.msra.mxu0 %v194
  %272 = vmatpush.msra.mxu0 %v193
  %273 = vmatpush.msra.mxu0 %v192
  %274 = vmatpush.msra.mxu0 %v191
  %275 = vmatmul.f32.gmra.mxu0 %v187
  %v276 = vpop.f32.mrf.mxu0
  %v277 = vadd.f32 %v257, %v276
  %278 = vdwg.mxu0
  %279 = vmatpush.msra.mxu0 %v222
  %280 = vmatpush.msra.mxu0 %v221
  %281 = vmatpush.msra.mxu0 %v220
  %282 = vmatpush.msra.mxu0 %v219
  %283 = vmatpush.msra.mxu0 %v218
  %284 = vmatpush.msra.mxu0 %v217
  %285 = vmatpush.msra.mxu0 %v216
  %286 = vmatpush.msra.mxu0 %v215
  %287 = vmatpush.msra.mxu0 %v214
  %288 = vmatpush.msra.mxu0 %v213
  %289 = vmatpush.msra.mxu0 %v212
  %290 = vmatpush.msra.mxu0 %v211
  %291 = vmatpush.msra.mxu0 %v210
  %292 = vmatpush.msra.mxu0 %v209
  %293 = vmatpush.msra.mxu0 %v208
  %294 = vmatpush.msra.mxu0 %v207
  %295 = vmatmul.f32.gmra.mxu0 %v188
  %v296 = vpop.f32.mrf.mxu0
  %v297 = vadd.f32 %v277, %v296
  %298 = vdwg.mxu0
  %299 = vmatpush.msra.mxu0 %v238
  %300 = vmatpush.msra.mxu0 %v237
  %301 = vmatpush.msra.mxu0 %v236
  %302 = vmatpush.msra.mxu0 %v235
  %303 = vmatpush.msra.mxu0 %v234
  %304 = vmatpush.msra.mxu0 %v233
  %305 = vmatpush.msra.mxu0 %v232
  %306 = vmatpush.msra.mxu0 %v231
  %307 = vmatpush.msra.mxu0 %v230
  %308 = vmatpush.msra.mxu0 %v229
  %309 = vmatpush.msra.mxu0 %v228
  %310 = vmatpush.msra.mxu0 %v227
  %311 = vmatpush.msra.mxu0 %v226
  %312 = vmatpush.msra.mxu0 %v225
  %313 = vmatpush.msra.mxu0 %v224
  %314 = vmatpush.msra.mxu0 %v223
  %315 = vmatmul.f32.gmra.mxu0 %v189
  %v316 = vpop.f32.mrf.mxu0
  %v317 = vadd.f32 %v297, %v316
  %318 = vdwg.mxu0
  %319 = vmatpush.msra.mxu0 %v254
  %320 = vmatpush.msra.mxu0 %v253
  %321 = vmatpush.msra.mxu0 %v252
  %322 = vmatpush.msra.mxu0 %v251
  %323 = vmatpush.msra.mxu0 %v250
  %324 = vmatpush.msra.mxu0 %v249
  %325 = vmatpush.msra.mxu0 %v248
  %326 = vmatpush.msra.mxu0 %v247
  %327 = vmatpush.msra.mxu0 %v246
  %328 = vmatpush.msra.mxu0 %v245
  %329 = vmatpush.msra.mxu0 %v244
  %330 = vmatpush.msra.mxu0 %v243
  %331 = vmatpush.msra.mxu0 %v242
  %332 = vmatpush.msra.mxu0 %v241
  %333 = vmatpush.msra.mxu0 %v240
  %334 = vmatpush.msra.mxu0 %v239
  %335 = vmatmul.f32.gmra.mxu0 %v190
  %v336 = vpop.f32.mrf.mxu0
  %v337 = vadd.f32 %v317, %v336
  %338 = vdwg.mxu0
  %v339 = vld [vmem:[%s5] sm:$0xff]
  %v340 = vld [vmem:[%s5 + $0x8] sm:$0xff]
  %v341 = vld [vmem:[%s5 + $0x10] sm:$0xff]
  %v342 = vld [vmem:[%s5 + $0x18] sm:$0xff]
  %v343 = vld [vmem:[%s5 + $0x20] sm:$0xff]
  %v344 = vld [vmem:[%s5 + $0x28] sm:$0xff]
  %v345 = vld [vmem:[%s5 + $0x30] sm:$0xff]
  %v346 = vld [vmem:[%s5 + $0x38] sm:$0xff]
  %v347 = vld [vmem:[%s5 + $0x40] sm:$0xff]
  %v348 = vld [vmem:[%s5 + $0x48] sm:$0xff]
  %v349 = vld [vmem:[%s5 + $0x50] sm:$0xff]
  %v350 = vld [vmem:[%s5 + $0x58] sm:$0xff]
  %v351 = vld [vmem:[%s5 + $0x60] sm:$0xff]
  %v352 = vld [vmem:[%s5 + $0x68] sm:$0xff]
  %v353 = vld [vmem:[%s5 + $0x70] sm:$0xff]
  %v354 = vld [vmem:[%s5 + $0x78] sm:$0xff]
  %v355 = vld [vmem:[%s5 + $0x80] sm:$0xff]
  %v356 = vld [vmem:[%s5 + $0x88] sm:$0xff]
  %v357 = vld [vmem:[%s5 + $0x90] sm:$0xff]
  %v358 = vld [vmem:[%s5 + $0x98] sm:$0xff]
  %v359 = vld [vmem:[%s5 + $0xa0] sm:$0xff]
  %v360 = vld [vmem:[%s5 + $0xa8] sm:$0xff]
  %v361 = vld [vmem:[%s5 + $0xb0] sm:$0xff]
  %v362 = vld [vmem:[%s5 + $0xb8] sm:$0xff]
  %v363 = vld [vmem:[%s5 + $0xc0] sm:$0xff]
  %v364 = vld [vmem:[%s5 + $0xc8] sm:$0xff]
  %v365 = vld [vmem:[%s5 + $0xd0] sm:$0xff]
  %v366 = vld [vmem:[%s5 + $0xd8] sm:$0xff]
  %v367 = vld [vmem:[%s5 + $0xe0] sm:$0xff]
  %v368 = vld [vmem:[%s5 + $0xe8] sm:$0xff]
  %v369 = vld [vmem:[%s5 + $0xf0] sm:$0xff]
  %v370 = vld [vmem:[%s5 + $0xf8] sm:$0xff]
  %v371 = vld [vmem:[%s5 + $0x100] sm:$0xff]
  %v372 = vld [vmem:[%s5 + $0x108] sm:$0xff]
  %v373 = vld [vmem:[%s5 + $0x110] sm:$0xff]
  %v374 = vld [vmem:[%s5 + $0x118] sm:$0xff]
  %v375 = vld [vmem:[%s5 + $0x120] sm:$0xff]
  %v376 = vld [vmem:[%s5 + $0x128] sm:$0xff]
  %v377 = vld [vmem:[%s5 + $0x130] sm:$0xff]
  %v378 = vld [vmem:[%s5 + $0x138] sm:$0xff]
  %v379 = vld [vmem:[%s5 + $0x140] sm:$0xff]
  %v380 = vld [vmem:[%s5 + $0x148] sm:$0xff]
  %v381 = vld [vmem:[%s5 + $0x150] sm:$0xff]
  %v382 = vld [vmem:[%s5 + $0x158] sm:$0xff]
  %v383 = vld [vmem:[%s5 + $0x160] sm:$0xff]
  %v384 = vld [vmem:[%s5 + $0x168] sm:$0xff]
  %v385 = vld [vmem:[%s5 + $0x170] sm:$0xff]
  %v386 = vld [vmem:[%s5 + $0x178] sm:$0xff]
  %v387 = vld [vmem:[%s5 + $0x180] sm:$0xff]
  %v388 = vld [vmem:[%s5 + $0x188] sm:$0xff]
  %v389 = vld [vmem:[%s5 + $0x190] sm:$0xff]
  %v390 = vld [vmem:[%s5 + $0x198] sm:$0xff]
  %v391 = vld [vmem:[%s5 + $0x1a0] sm:$0xff]
  %v392 = vld [vmem:[%s5 + $0x1a8] sm:$0xff]
  %v393 = vld [vmem:[%s5 + $0x1b0] sm:$0xff]
  %v394 = vld [vmem:[%s5 + $0x1b8] sm:$0xff]
  %v395 = vld [vmem:[%s5 + $0x1c0] sm:$0xff]
  %v396 = vld [vmem:[%s5 + $0x1c8] sm:$0xff]
  %v397 = vld [vmem:[%s5 + $0x1d0] sm:$0xff]
  %v398 = vld [vmem:[%s5 + $0x1d8] sm:$0xff]
  %v399 = vld [vmem:[%s5 + $0x1e0] sm:$0xff]
  %v400 = vld [vmem:[%s5 + $0x1e8] sm:$0xff]
  %v401 = vld [vmem:[%s5 + $0x1f0] sm:$0xff]
  %v402 = vld [vmem:[%s5 + $0x1f8] sm:$0xff]
  %v403 = vld [vmem:[%s6] sm:$0xf]
  %v405 = vperm.slane %v403, 0
  %v406 = vperm.slane %v403, 1
  %v407 = vperm.slane %v403, 2
  %v408 = vperm.slane %v403, 3
  %413 = vmatpush.msra.mxu0 %v399
  %414 = vmatpush.msra.mxu0 %v395
  %415 = vmatpush.msra.mxu0 %v391
  %416 = vmatpush.msra.mxu0 %v387
  %417 = vmatpush.msra.mxu0 %v383
  %418 = vmatpush.msra.mxu0 %v379
  %419 = vmatpush.msra.mxu0 %v375
  %420 = vmatpush.msra.mxu0 %v371
  %421 = vmatpush.msra.mxu0 %v367
  %422 = vmatpush.msra.mxu0 %v363
  %423 = vmatpush.msra.mxu0 %v359
  %424 = vmatpush.msra.mxu0 %v355
  %425 = vmatpush.msra.mxu0 %v351
  %426 = vmatpush.msra.mxu0 %v347
  %427 = vmatpush.msra.mxu0 %v343
  %428 = vmatpush.msra.mxu0 %v339
  %429 = vmatmul.f32.gmra.mxu0 %v32
  %v430 = vpop.f32.mrf.mxu0
  %v431 = vadd.f32 %v405, %v430
  %432 = vdwg.mxu0
  %433 = vmatpush.msra.mxu0 %v400
  %434 = vmatpush.msra.mxu0 %v396
  %435 = vmatpush.msra.mxu0 %v392
  %436 = vmatpush.msra.mxu0 %v388
  %437 = vmatpush.msra.mxu0 %v384
  %438 = vmatpush.msra.mxu0 %v380
  %439 = vmatpush.msra.mxu0 %v376
  %440 = vmatpush.msra.mxu0 %v372
  %441 = vmatpush.msra.mxu0 %v368
  %442 = vmatpush.msra.mxu0 %v364
  %443 = vmatpush.msra.mxu0 %v360
  %444 = vmatpush.msra.mxu0 %v356
  %445 = vmatpush.msra.mxu0 %v352
  %446 = vmatpush.msra.mxu0 %v348
  %447 = vmatpush.msra.mxu0 %v344
  %448 = vmatpush.msra.mxu0 %v340
  %449 = vmatmul.f32.gmra.mxu0 %v32
  %v450 = vpop.f32.mrf.mxu0
  %v451 = vadd.f32 %v406, %v450
  %452 = vdwg.mxu0
  %453 = vmatpush.msra.mxu0 %v401
  %454 = vmatpush.msra.mxu0 %v397
  %455 = vmatpush.msra.mxu0 %v393
  %456 = vmatpush.msra.mxu0 %v389
  %457 = vmatpush.msra.mxu0 %v385
  %458 = vmatpush.msra.mxu0 %v381
  %459 = vmatpush.msra.mxu0 %v377
  %460 = vmatpush.msra.mxu0 %v373
  %461 = vmatpush.msra.mxu0 %v369
  %462 = vmatpush.msra.mxu0 %v365
  %463 = vmatpush.msra.mxu0 %v361
  %464 = vmatpush.msra.mxu0 %v357
  %465 = vmatpush.msra.mxu0 %v353
  %466 = vmatpush.msra.mxu0 %v349
  %467 = vmatpush.msra.mxu0 %v345
  %468 = vmatpush.msra.mxu0 %v341
  %469 = vmatmul.f32.gmra.mxu0 %v32
  %v470 = vpop.f32.mrf.mxu0
  %v471 = vadd.f32 %v407, %v470
  %472 = vdwg.mxu0
  %473 = vmatpush.msra.mxu0 %v402
  %474 = vmatpush.msra.mxu0 %v398
  %475 = vmatpush.msra.mxu0 %v394
  %476 = vmatpush.msra.mxu0 %v390
  %477 = vmatpush.msra.mxu0 %v386
  %478 = vmatpush.msra.mxu0 %v382
  %479 = vmatpush.msra.mxu0 %v378
  %480 = vmatpush.msra.mxu0 %v374
  %481 = vmatpush.msra.mxu0 %v370
  %482 = vmatpush.msra.mxu0 %v366
  %483 = vmatpush.msra.mxu0 %v362
  %484 = vmatpush.msra.mxu0 %v358
  %485 = vmatpush.msra.mxu0 %v354
  %486 = vmatpush.msra.mxu0 %v350
  %487 = vmatpush.msra.mxu0 %v346
  %488 = vmatpush.msra.mxu0 %v342
  %489 = vmatmul.f32.gmra.mxu0 %v32
  %v490 = vpop.f32.mrf.mxu0
  %v491 = vadd.f32 %v408, %v490
  %492 = vdwg.mxu0
  %v493 = vmax.f32 %v431, 0.0
  %v494 = vmax.f32 %v451, 0.0
  %v495 = vmax.f32 %v471, 0.0
  %v496 = vmax.f32 %v491, 0.0
  %v497 = vld [vmem:[%s7] sm:$0xff]
  %v498 = vld [vmem:[%s7 + $0x8] sm:$0xff]
  %v499 = vld [vmem:[%s7 + $0x10] sm:$0xff]
  %v500 = vld [vmem:[%s7 + $0x18] sm:$0xff]
  %v501 = vld [vmem:[%s7 + $0x20] sm:$0xff]
  %v502 = vld [vmem:[%s7 + $0x28] sm:$0xff]
  %v503 = vld [vmem:[%s7 + $0x30] sm:$0xff]
  %v504 = vld [vmem:[%s7 + $0x38] sm:$0xff]
  %v505 = vld [vmem:[%s7 + $0x40] sm:$0xff]
  %v506 = vld [vmem:[%s7 + $0x48] sm:$0xff]
  %v507 = vld [vmem:[%s7 + $0x50] sm:$0xff]
  %v508 = vld [vmem:[%s7 + $0x58] sm:$0xff]
  %v509 = vld [vmem:[%s7 + $0x60] sm:$0xff]
  %v510 = vld [vmem:[%s7 + $0x68] sm:$0xff]
  %v511 = vld [vmem:[%s7 + $0x70] sm:$0xff]
  %v512 = vld [vmem:[%s7 + $0x78] sm:$0xff]
  %v513 = vld [vmem:[%s7 + $0x80] sm:$0xff]
  %v514 = vld [vmem:[%s7 + $0x88] sm:$0xff]
  %v515 = vld [vmem:[%s7 + $0x90] sm:$0xff]
  %v516 = vld [vmem:[%s7 + $0x98] sm:$0xff]
  %v517 = vld [vmem:[%s7 + $0xa0] sm:$0xff]
  %v518 = vld [vmem:[%s7 + $0xa8] sm:$0xff]
  %v519 = vld [vmem:[%s7 + $0xb0] sm:$0xff]
  %v520 = vld [vmem:[%s7 + $0xb8] sm:$0xff]
  %v521 = vld [vmem:[%s7 + $0xc0] sm:$0xff]
  %v522 = vld [vmem:[%s7 + $0xc8] sm:$0xff]
  %v523 = vld [vmem:[%s7 + $0xd0] sm:$0xff]
  %v524 = vld [vmem:[%s7 + $0xd8] sm:$0xff]
  %v525 = vld [vmem:[%s7 + $0xe0] sm:$0xff]
  %v526 = vld [vmem:[%s7 + $0xe8] sm:$0xff]
  %v527 = vld [vmem:[%s7 + $0xf0] sm:$0xff]
  %v528 = vld [vmem:[%s7 + $0xf8] sm:$0xff]
  %v529 = vld [vmem:[%s7 + $0x100] sm:$0xff]
  %v530 = vld [vmem:[%s7 + $0x108] sm:$0xff]
  %v531 = vld [vmem:[%s7 + $0x110] sm:$0xff]
  %v532 = vld [vmem:[%s7 + $0x118] sm:$0xff]
  %v533 = vld [vmem:[%s7 + $0x120] sm:$0xff]
  %v534 = vld [vmem:[%s7 + $0x128] sm:$0xff]
  %v535 = vld [vmem:[%s7 + $0x130] sm:$0xff]
  %v536 = vld [vmem:[%s7 + $0x138] sm:$0xff]
  %v537 = vld [vmem:[%s7 + $0x140] sm:$0xff]
  %v538 = vld [vmem:[%s7 + $0x148] sm:$0xff]
  %v539 = vld [vmem:[%s7 + $0x150] sm:$0xff]
  %v540 = vld [vmem:[%s7 + $0x158] sm:$0xff]
  %v541 = vld [vmem:[%s7 + $0x160] sm:$0xff]
  %v542 = vld [vmem:[%s7 + $0x168] sm:$0xff]
  %v543 = vld [vmem:[%s7 + $0x170] sm:$0xff]
  %v544 = vld [vmem:[%s7 + $0x178] sm:$0xff]
  %v545 = vld [vmem:[%s7 + $0x180] sm:$0xff]
  %v546 = vld [vmem:[%s7 + $0x188] sm:$0xff]
  %v547 = vld [vmem:[%s7 + $0x190] sm:$0xff]
  %v548 = vld [vmem:[%s7 + $0x198] sm:$0xff]
  %v549 = vld [vmem:[%s7 + $0x1a0] sm:$0xff]
  %v550 = vld [vmem:[%s7 + $0x1a8] sm:$0xff]
  %v551 = vld [vmem:[%s7 + $0x1b0] sm:$0xff]
  %v552 = vld [vmem:[%s7 + $0x1b8] sm:$0xff]
  %v553 = vld [vmem:[%s7 + $0x1c0] sm:$0xff]
  %v554 = vld [vmem:[%s7 + $0x1c8] sm:$0xff]
  %v555 = vld [vmem:[%s7 + $0x1d0] sm:$0xff]
  %v556 = vld [vmem:[%s7 + $0x1d8] sm:$0xff]
  %v557 = vld [vmem:[%s7 + $0x1e0] sm:$0xff]
  %v558 = vld [vmem:[%s7 + $0x1e8] sm:$0xff]
  %v559 = vld [vmem:[%s7 + $0x1f0] sm:$0xff]
  %v560 = vld [vmem:[%s7 + $0x1f8] sm:$0xff]
  %v561 = vld [vmem:[%s8] sm:$0x1]
  %v563 = vperm.slane %v561, 0
  %565 = vmatpush.msra.mxu0 %v512
  %566 = vmatpush.msra.mxu0 %v511
  %567 = vmatpush.msra.mxu0 %v510
  %568 = vmatpush.msra.mxu0 %v509
  %569 = vmatpush.msra.mxu0 %v508
  %570 = vmatpush.msra.mxu0 %v507
  %571 = vmatpush.msra.mxu0 %v506
  %572 = vmatpush.msra.mxu0 %v505
  %573 = vmatpush.msra.mxu0 %v504
  %574 = vmatpush.msra.mxu0 %v503
  %575 = vmatpush.msra.mxu0 %v502
  %576 = vmatpush.msra.mxu0 %v501
  %577 = vmatpush.msra.mxu0 %v500
  %578 = vmatpush.msra.mxu0 %v499
  %579 = vmatpush.msra.mxu0 %v498
  %580 = vmatpush.msra.mxu0 %v497
  %581 = vmatmul.f32.gmra.mxu0 %v493
  %v582 = vpop.f32.mrf.mxu0
  %v583 = vadd.f32 %v563, %v582
  %584 = vdwg.mxu0
  %585 = vmatpush.msra.mxu0 %v528
  %586 = vmatpush.msra.mxu0 %v527
  %587 = vmatpush.msra.mxu0 %v526
  %588 = vmatpush.msra.mxu0 %v525
  %589 = vmatpush.msra.mxu0 %v524
  %590 = vmatpush.msra.mxu0 %v523
  %591 = vmatpush.msra.mxu0 %v522
  %592 = vmatpush.msra.mxu0 %v521
  %593 = vmatpush.msra.mxu0 %v520
  %594 = vmatpush.msra.mxu0 %v519
  %595 = vmatpush.msra.mxu0 %v518
  %596 = vmatpush.msra.mxu0 %v517
  %597 = vmatpush.msra.mxu0 %v516
  %598 = vmatpush.msra.mxu0 %v515
  %599 = vmatpush.msra.mxu0 %v514
  %600 = vmatpush.msra.mxu0 %v513
  %601 = vmatmul.f32.gmra.mxu0 %v494
  %v602 = vpop.f32.mrf.mxu0
  %v603 = vadd.f32 %v583, %v602
  %604 = vdwg.mxu0
  %605 = vmatpush.msra.mxu0 %v544
  %606 = vmatpush.msra.mxu0 %v543
  %607 = vmatpush.msra.mxu0 %v542
  %608 = vmatpush.msra.mxu0 %v541
  %609 = vmatpush.msra.mxu0 %v540
  %610 = vmatpush.msra.mxu0 %v539
  %611 = vmatpush.msra.mxu0 %v538
  %612 = vmatpush.msra.mxu0 %v537
  %613 = vmatpush.msra.mxu0 %v536
  %614 = vmatpush.msra.mxu0 %v535
  %615 = vmatpush.msra.mxu0 %v534
  %616 = vmatpush.msra.mxu0 %v533
  %617 = vmatpush.msra.mxu0 %v532
  %618 = vmatpush.msra.mxu0 %v531
  %619 = vmatpush.msra.mxu0 %v530
  %620 = vmatpush.msra.mxu0 %v529
  %621 = vmatmul.f32.gmra.mxu0 %v495
  %v622 = vpop.f32.mrf.mxu0
  %v623 = vadd.f32 %v603, %v622
  %624 = vdwg.mxu0
  %625 = vmatpush.msra.mxu0 %v560
  %626 = vmatpush.msra.mxu0 %v559
  %627 = vmatpush.msra.mxu0 %v558
  %628 = vmatpush.msra.mxu0 %v557
  %629 = vmatpush.msra.mxu0 %v556
  %630 = vmatpush.msra.mxu0 %v555
  %631 = vmatpush.msra.mxu0 %v554
  %632 = vmatpush.msra.mxu0 %v553
  %633 = vmatpush.msra.mxu0 %v552
  %634 = vmatpush.msra.mxu0 %v551
  %635 = vmatpush.msra.mxu0 %v550
  %636 = vmatpush.msra.mxu0 %v549
  %637 = vmatpush.msra.mxu0 %v548
  %638 = vmatpush.msra.mxu0 %v547
  %639 = vmatpush.msra.mxu0 %v546
  %640 = vmatpush.msra.mxu0 %v545
  %641 = vmatmul.f32.gmra.mxu0 %v496
  %v642 = vpop.f32.mrf.mxu0
  %v643 = vadd.f32 %v623, %v642
  %644 = vdwg.mxu0
  %645 = vadd.xlane.f32.xlu0 %v643
  %v646 = vpop.xlane.xlu0 %645
  %v647 = vmul.f32 %v646, 0.16666667
  %v648 = vadd.f32 %v337, %v643
  %v649 = vsub.f32 %v648, %v647
  %650 = vst [vmem:[%s9] sm:$0xff] %v649
  // Predicated region
  $region38: #{meta_controller_forward.7} parent=0 // pred_check
    _
  $region39: #{meta_controller_forward.7} parent=0 // pred_check_branch
    %652 = sbr.rel (0) target = $region41
  $region40: #{meta_controller_forward.7} parent=0 // pred_region
    _
  $region41: #{meta_controller_forward.7} parent=0 // pred_fallthru
    _
  // Predicated region
  $region42: #{meta_controller_forward.7} parent=0 // pred_check
    _
  $region43: #{meta_controller_forward.7} parent=0 // pred_check_branch
    %654 = sbr.rel (0) target = $region45
  $region44: #{meta_controller_forward.7} parent=0 // pred_region
    _
  $region45: #{meta_controller_forward.7} parent=0 // pred_fallthru
    _

</llo_original>
